<compile_context>
chip_gen: v6e
topology: v6e:2x2x1
jax: 0.10.0
libtpu: 0.0.40
codegen_flags: <defaults>
</compile_context>

<pallas_src>
import jax
import jax.numpy as jnp
from jax import lax
from jax.experimental import pallas as pl
from jax.experimental.pallas import tpu as pltpu

BN_EPS = 1e-5


def _round_up(x, m):
    return ((x + m - 1) // m) * m


# ----------------------------- Pallas kernels ------------------------------ #

def _upconv_kernel(x_ref, w_ref, b_ref, o_ref):
    # ConvTranspose2d(k=2, s=2) == one matmul per input pixel producing the 2x2
    # output patch.  x: [W, Cin], w: [Cin, 4*Cup_pad] (resident), b: [1, 4*Cup_pad].
    o_ref[...] = (
        jnp.dot(x_ref[...], w_ref[...], preferred_element_type=jnp.float32)
        + b_ref[...]
    )


def _conv3_stats_kernel(t0_ref, t1_ref, t2_ref, w_ref, b_ref, o_ref, stats_ref):
    # One output image-row per grid step.
    #   t{dy}_ref: [W, 3*Cin]  width-folded row-tap dy of the padded input
    #   w_ref:     [3, 3*Cin, Cout_pad]  (VMEM-resident across the grid)
    #   b_ref:     [1, Cout_pad]
    #   o_ref:     [W, Cout_pad]         raw conv output tile (lane-dense)
    #   stats_ref: [8, Cout_pad]         per-image accumulator: row0=sum, row1=sumsq
    h = pl.program_id(1)

    acc = jnp.dot(t0_ref[...], w_ref[0], preferred_element_type=jnp.float32)
    acc = acc + jnp.dot(t1_ref[...], w_ref[1], preferred_element_type=jnp.float32)
    acc = acc + jnp.dot(t2_ref[...], w_ref[2], preferred_element_type=jnp.float32)
    acc = acc + b_ref[...]
    o_ref[...] = acc

    @pl.when(h == 0)
    def _():
        stats_ref[...] = jnp.zeros_like(stats_ref)

    stats_ref[0:1, :] = stats_ref[0:1, :] + jnp.sum(acc, axis=0, keepdims=True)
    stats_ref[1:2, :] = stats_ref[1:2, :] + jnp.sum(acc * acc, axis=0, keepdims=True)


def _bn_relu_kernel(x_ref, scale_ref, shift_ref, o_ref):
    # y = relu(x * scale + shift), scale/shift fold BN mean/var/gamma/beta.
    o_ref[...] = jnp.maximum(x_ref[...] * scale_ref[...] + shift_ref[...], 0.0)


# ------------------------------- wrappers ---------------------------------- #

def upconv2x2_stride2(x_nhwc, w, b):
    # w: [Cin, Cup, 2, 2] (PyTorch ConvTranspose2d layout), b: [Cup]
    N, H, W, Cin = x_nhwc.shape
    Cup = w.shape[1]
    K = 4 * Cup
    Kp = _round_up(K, 128)

    # flattened output-channel order: (ki, kj, o)
    w_mat = jnp.transpose(w, (0, 2, 3, 1)).reshape(Cin, K)
    w_mat = jnp.pad(w_mat, ((0, 0), (0, Kp - K)))
    b_mat = jnp.pad(jnp.tile(b, 4), (0, Kp - K)).reshape(1, Kp)

    out = pl.pallas_call(
        _upconv_kernel,
        out_shape=jax.ShapeDtypeStruct((N, H, W, Kp), jnp.float32),
        grid=(N, H),
        in_specs=[
            pl.BlockSpec((None, None, W, Cin), lambda n, h: (n, h, 0, 0)),
            pl.BlockSpec((Cin, Kp), lambda n, h: (0, 0)),   # resident weights
            pl.BlockSpec((1, Kp), lambda n, h: (0, 0)),     # resident bias
        ],
        out_specs=pl.BlockSpec((None, None, W, Kp), lambda n, h: (n, h, 0, 0)),
        compiler_params=pltpu.CompilerParams(
            dimension_semantics=("parallel", "parallel")),
    )(x_nhwc, w_mat, b_mat)

    # 2x2 interleave (wrapper layout glue)
    out = out[..., :K].reshape(N, H, W, 2, 2, Cup)
    out = jnp.transpose(out, (0, 1, 3, 2, 4, 5)).reshape(N, 2 * H, 2 * W, Cup)
    return out


def conv3x3_bn_relu(x_nhwc, w, b, gamma, beta):
    # w: [Cout, Cin, 3, 3] (PyTorch Conv2d layout). Returns [N, H, W, Cout].
    N, H, W, Cin = x_nhwc.shape
    Cout = w.shape[0]
    assert w.shape[1] == Cin
    Cp = _round_up(Cout, 128)
    K = 3 * Cin

    # Width-folded padded slab: [N, H+2, W, 3*Cin] (single 3x duplication).
    xp = jnp.pad(x_nhwc, ((0, 0), (1, 1), (1, 1), (0, 0)))
    slab = jnp.concatenate([xp[:, :, dx:dx + W, :] for dx in range(3)], axis=-1)

    # Weights: [Cout, Cin, 3, 3] -> [3(dy), 3*Cin(dx,cin), Cout_pad]
    w_t = jnp.transpose(w, (2, 3, 1, 0)).reshape(3, K, Cout)
    w_fold = jnp.pad(w_t, ((0, 0), (0, 0), (0, Cp - Cout)))
    b_p = jnp.pad(b, (0, Cp - Cout)).reshape(1, Cp)

    row_block = pl.BlockSpec((None, None, W, K), lambda n, h: (n, h, 0, 0))
    row_block1 = pl.BlockSpec((None, None, W, K), lambda n, h: (n, h + 1, 0, 0))
    row_block2 = pl.BlockSpec((None, None, W, K), lambda n, h: (n, h + 2, 0, 0))

    conv_out, stats = pl.pallas_call(
        _conv3_stats_kernel,
        out_shape=(
            jax.ShapeDtypeStruct((N, H, W, Cp), jnp.float32),
            jax.ShapeDtypeStruct((N, 8, Cp), jnp.float32),
        ),
        grid=(N, H),
        in_specs=[
            row_block, row_block1, row_block2,                   # 3 row taps, same slab
            pl.BlockSpec((3, K, Cp), lambda n, h: (0, 0, 0)),    # resident weights
            pl.BlockSpec((1, Cp), lambda n, h: (0, 0)),          # resident bias
        ],
        out_specs=(
            pl.BlockSpec((None, None, W, Cp), lambda n, h: (n, h, 0, 0)),
            pl.BlockSpec((None, 8, Cp), lambda n, h: (n, 0, 0)),  # per-image accumulator
        ),
        compiler_params=pltpu.CompilerParams(
            dimension_semantics=("parallel", "arbitrary")),
    )(slab, slab, slab, w_fold, b_p)

    # Finish exact batch statistics (tiny cross-image reduction; XLA glue).
    M = N * H * W
    s = jnp.sum(stats[:, 0, :], axis=0)
    ss = jnp.sum(stats[:, 1, :], axis=0)
    mean = s / M
    var = jnp.maximum(ss / M - mean * mean, 0.0)       # biased variance (BN train mode)
    g_p = jnp.pad(gamma, (0, Cp - Cout))
    bt_p = jnp.pad(beta, (0, Cp - Cout))
    inv = lax.rsqrt(var + BN_EPS)
    scale = (g_p * inv).reshape(1, Cp)
    shift = (bt_p - mean * g_p * inv).reshape(1, Cp)

    y = pl.pallas_call(
        _bn_relu_kernel,
        out_shape=jax.ShapeDtypeStruct((N, H, W, Cp), jnp.float32),
        grid=(N, H),
        in_specs=[
            pl.BlockSpec((None, None, W, Cp), lambda n, h: (n, h, 0, 0)),
            pl.BlockSpec((1, Cp), lambda n, h: (0, 0)),
            pl.BlockSpec((1, Cp), lambda n, h: (0, 0)),
        ],
        out_specs=pl.BlockSpec((None, None, W, Cp), lambda n, h: (n, h, 0, 0)),
        compiler_params=pltpu.CompilerParams(
            dimension_semantics=("parallel", "parallel")),
    )(conv_out, scale, shift)

    return y[..., :Cout]


def up_forward(x1_nchw, x2_nchw, p):
    """PyTorch `Up.forward(x1, x2)` with NCHW inputs/outputs."""
    x1 = jnp.transpose(x1_nchw, (0, 2, 3, 1))
    x2 = jnp.transpose(x2_nchw, (0, 2, 3, 1))
    x1u = upconv2x2_stride2(x1, p["up_w"], p["up_b"])
    x = jnp.concatenate([x2, x1u], axis=-1)            # torch.cat([x2, x1], dim=1)
    h = conv3x3_bn_relu(x, p["c1_w"], p["c1_b"], p["bn1_g"], p["bn1_b"])
    h = conv3x3_bn_relu(h, p["c2_w"], p["c2_b"], p["bn2_g"], p["bn2_b"])
    return jnp.transpose(h, (0, 3, 1, 2))


# ----------------------- pure-JAX reference (for check) -------------------- #

def _bn_relu_ref(x, g, b):
    m = jnp.mean(x, axis=(0, 1, 2), keepdims=True)
    v = jnp.mean((x - m) ** 2, axis=(0, 1, 2), keepdims=True)
    return jnp.maximum((x - m) / jnp.sqrt(v + BN_EPS) * g + b, 0.0)


def up_forward_ref(x1_nchw, x2_nchw, p):
    x1 = jnp.transpose(x1_nchw, (0, 2, 3, 1))
    x2 = jnp.transpose(x2_nchw, (0, 2, 3, 1))
    # ConvTranspose2d(k=2, s=2) as input-dilated conv with spatially flipped kernel.
    w_up = jnp.transpose(p["up_w"][:, :, ::-1, ::-1], (2, 3, 0, 1))  # HWIO
    x1u = lax.conv_general_dilated(
        x1, w_up, window_strides=(1, 1), padding=[(1, 1), (1, 1)],
        lhs_dilation=(2, 2), dimension_numbers=("NHWC", "HWIO", "NHWC"),
    ) + p["up_b"]
    x = jnp.concatenate([x2, x1u], axis=-1)

    def conv(xx, w, b):
        w_hwio = jnp.transpose(w, (2, 3, 1, 0))
        return lax.conv_general_dilated(
            xx, w_hwio, (1, 1), [(1, 1), (1, 1)],
            dimension_numbers=("NHWC", "HWIO", "NHWC"),
        ) + b

    h = _bn_relu_ref(conv(x, p["c1_w"], p["c1_b"]), p["bn1_g"], p["bn1_b"])
    h = _bn_relu_ref(conv(h, p["c2_w"], p["c2_b"]), p["bn2_g"], p["bn2_b"])
    return jnp.transpose(h, (0, 3, 1, 2))


# ---------------------------------- main ------------------------------------ #

if __name__ == "__main__":
    in_channels, out_channels = 8, 4
    N, H1, W1 = 2, 8, 8           # x1 spatial; x2 is 2x larger (skip connection)
    cup = in_channels // 2

    key = jax.random.PRNGKey(0)
    ks = jax.random.split(key, 8)
    params = {
        "up_w": 0.1 * jax.random.normal(ks[0], (in_channels, cup, 2, 2), jnp.float32),
        "up_b": 0.1 * jax.random.normal(ks[1], (cup,), jnp.float32),
        "c1_w": 0.1 * jax.random.normal(ks[2], (out_channels, in_channels, 3, 3), jnp.float32),
        "c1_b": 0.1 * jax.random.normal(ks[3], (out_channels,), jnp.float32),
        "bn1_g": jnp.ones((out_channels,), jnp.float32),   # BatchNorm default init
        "bn1_b": jnp.zeros((out_channels,), jnp.float32),
        "c2_w": 0.1 * jax.random.normal(ks[4], (out_channels, out_channels, 3, 3), jnp.float32),
        "c2_b": 0.1 * jax.random.normal(ks[5], (out_channels,), jnp.float32),
        "bn2_g": jnp.ones((out_channels,), jnp.float32),
        "bn2_b": jnp.zeros((out_channels,), jnp.float32),
    }

    x1 = jax.random.normal(ks[6], (N, in_channels, H1, W1), jnp.float32)       # NCHW
    x2 = jax.random.normal(ks[7], (N, cup, 2 * H1, 2 * W1), jnp.float32)       # NCHW

    up_fwd = jax.jit(up_forward)
    out = jax.block_until_ready(up_fwd(x1, x2, params))
    ref = jax.block_until_ready(up_forward_ref(x1, x2, params))

    assert out.shape == (N, out_channels, 2 * H1, 2 * W1), out.shape
    err = float(jnp.max(jnp.abs(out - ref)))
    assert jnp.allclose(out, ref, atol=2e-3, rtol=2e-3), err
    print("KERNEL_OK")
</pallas_src>

<mosaic_0001>
module attributes {stable_mosaic.version = 11 : i64} {
  func.func @_upconv_kernel(%arg0: i32, %arg1: i32, %arg2: memref<1x1x8x8xf32, #tpu.memory_space<vmem>>, %arg3: memref<8x128xf32, #tpu.memory_space<vmem>>, %arg4: memref<1x128xf32, #tpu.memory_space<vmem>>, %arg5: memref<1x1x8x128xf32, #tpu.memory_space<vmem>>) attributes {dimension_semantics = [#tpu.dimension_semantics<parallel>, #tpu.dimension_semantics<parallel>], iteration_bounds = array<i64: 2, 8>, scalar_prefetch = 0 : i64, scratch_operands = 0 : i64, tpu.core_type = #tpu.core_type<tc>, window_params = [{transform_indices = @transform_0, window_bounds = array<i64: 1, 1, 8, 8>}, {pipeline_mode = #tpu.pipeline_mode<synchronous>, transform_indices = @transform_1, window_bounds = array<i64: 8, 128>}, {pipeline_mode = #tpu.pipeline_mode<synchronous>, transform_indices = @transform_2, window_bounds = array<i64: 1, 128>}, {transform_indices = @transform_3, window_bounds = array<i64: 1, 1, 8, 128>}]} {
    %c0 = arith.constant 0 : index
    %c0_0 = arith.constant 0 : index
    %c0_1 = arith.constant 0 : index
    %c0_2 = arith.constant 0 : index
    %0 = vector.load %arg2[%c0, %c0_0, %c0_1, %c0_2] : memref<1x1x8x8xf32, #tpu.memory_space<vmem>>, vector<1x1x8x8xf32>
    %1 = vector.shape_cast %0 : vector<1x1x8x8xf32> to vector<8x8xf32>
    %c0_3 = arith.constant 0 : index
    %c0_4 = arith.constant 0 : index
    %2 = vector.load %arg3[%c0_3, %c0_4] : memref<8x128xf32, #tpu.memory_space<vmem>>, vector<8x128xf32>
    %cst = arith.constant dense<0.000000e+00> : vector<8x128xf32>
    %3 = tpu.matmul %1, %2, %cst {dimension_numbers = #tpu.dot_dimension_numbers<[1], [0], [0], [1], [0, 0, 1, 1], [], []>} : vector<8x8xf32>, vector<8x128xf32>, vector<8x128xf32> -> vector<8x128xf32>
    %c0_5 = arith.constant 0 : index
    %c0_6 = arith.constant 0 : index
    %4 = vector.load %arg4[%c0_5, %c0_6] : memref<1x128xf32, #tpu.memory_space<vmem>>, vector<1x128xf32>
    %5 = vector.broadcast %4 : vector<1x128xf32> to vector<8x128xf32>
    %6 = arith.addf %3, %5 : vector<8x128xf32>
    %c0_7 = arith.constant 0 : index
    %c0_8 = arith.constant 0 : index
    %c0_9 = arith.constant 0 : index
    %c0_10 = arith.constant 0 : index
    %7 = vector.load %arg5[%c0_7, %c0_8, %c0_9, %c0_10] : memref<1x1x8x128xf32, #tpu.memory_space<vmem>>, vector<1x1x8x128xf32>
    %8 = vector.shape_cast %7 : vector<1x1x8x128xf32> to vector<8x128xf32>
    %9 = vector.shape_cast %6 : vector<8x128xf32> to vector<1x1x8x128xf32>
    tpu.vector_store %arg5[%c0_7, %c0_8, %c0_9, %c0_10], %9 {strides = array<i32>} : memref<1x1x8x128xf32, #tpu.memory_space<vmem>>, vector<1x1x8x128xf32>,
    return
  }
  func.func @transform_0(%arg0: i32, %arg1: i32) -> (i32, i32, i32, i32) {
    %c0_i32 = arith.constant 0 : i32
    %c0_i32_0 = arith.constant 0 : i32
    %c0_i32_1 = arith.constant 0 : i32
    return %arg0, %arg1, %c0_i32, %c0_i32_0 : i32, i32, i32, i32
  }
  func.func @transform_1(%arg0: i32, %arg1: i32) -> (i32, i32) {
    %c0_i32 = arith.constant 0 : i32
    %c0_i32_0 = arith.constant 0 : i32
    %c0_i32_1 = arith.constant 0 : i32
    return %c0_i32, %c0_i32_0 : i32, i32
  }
  func.func @transform_2(%arg0: i32, %arg1: i32) -> (i32, i32) {
    %c0_i32 = arith.constant 0 : i32
    %c0_i32_0 = arith.constant 0 : i32
    %c0_i32_1 = arith.constant 0 : i32
    return %c0_i32, %c0_i32_0 : i32, i32
  }
  func.func @transform_3(%arg0: i32, %arg1: i32) -> (i32, i32, i32, i32) {
    %c0_i32 = arith.constant 0 : i32
    %c0_i32_0 = arith.constant 0 : i32
    %c0_i32_1 = arith.constant 0 : i32
    return %arg0, %arg1, %c0_i32, %c0_i32_0 : i32, i32, i32, i32
  }
}

module attributes {stable_mosaic.version = 11 : i64} {
  func.func @_bn_relu_kernel(%arg0: i32, %arg1: i32, %arg2: memref<1x1x16x128xf32, #tpu.memory_space<vmem>>, %arg3: memref<1x128xf32, #tpu.memory_space<vmem>>, %arg4: memref<1x128xf32, #tpu.memory_space<vmem>>, %arg5: memref<1x1x16x128xf32, #tpu.memory_space<vmem>>) attributes {dimension_semantics = [#tpu.dimension_semantics<parallel>, #tpu.dimension_semantics<parallel>], iteration_bounds = array<i64: 2, 16>, scalar_prefetch = 0 : i64, scratch_operands = 0 : i64, tpu.core_type = #tpu.core_type<tc>, window_params = [{transform_indices = @transform_0, window_bounds = array<i64: 1, 1, 16, 128>}, {pipeline_mode = #tpu.pipeline_mode<synchronous>, transform_indices = @transform_1, window_bounds = array<i64: 1, 128>}, {pipeline_mode = #tpu.pipeline_mode<synchronous>, transform_indices = @transform_2, window_bounds = array<i64: 1, 128>}, {transform_indices = @transform_3, window_bounds = array<i64: 1, 1, 16, 128>}]} {
    %c0 = arith.constant 0 : index
    %c0_0 = arith.constant 0 : index
    %c0_1 = arith.constant 0 : index
    %c0_2 = arith.constant 0 : index
    %0 = vector.load %arg2[%c0, %c0_0, %c0_1, %c0_2] : memref<1x1x16x128xf32, #tpu.memory_space<vmem>>, vector<1x1x16x128xf32>
    %1 = vector.shape_cast %0 : vector<1x1x16x128xf32> to vector<16x128xf32>
    %c0_3 = arith.constant 0 : index
    %c0_4 = arith.constant 0 : index
    %2 = vector.load %arg3[%c0_3, %c0_4] : memref<1x128xf32, #tpu.memory_space<vmem>>, vector<1x128xf32>
    %3 = vector.broadcast %2 : vector<1x128xf32> to vector<16x128xf32>
    %4 = arith.mulf %1, %3 : vector<16x128xf32>
    %c0_5 = arith.constant 0 : index
    %c0_6 = arith.constant 0 : index
    %5 = vector.load %arg4[%c0_5, %c0_6] : memref<1x128xf32, #tpu.memory_space<vmem>>, vector<1x128xf32>
    %6 = vector.broadcast %5 : vector<1x128xf32> to vector<16x128xf32>
    %7 = arith.addf %4, %6 : vector<16x128xf32>
    %cst = arith.constant 0.000000e+00 : f32
    %8 = vector.broadcast %cst : f32 to vector<16x128xf32>
    %9 = arith.maximumf %7, %8 : vector<16x128xf32>
    %c0_7 = arith.constant 0 : index
    %c0_8 = arith.constant 0 : index
    %c0_9 = arith.constant 0 : index
    %c0_10 = arith.constant 0 : index
    %10 = vector.load %arg5[%c0_7, %c0_8, %c0_9, %c0_10] : memref<1x1x16x128xf32, #tpu.memory_space<vmem>>, vector<1x1x16x128xf32>
    %11 = vector.shape_cast %10 : vector<1x1x16x128xf32> to vector<16x128xf32>
    %12 = vector.shape_cast %9 : vector<16x128xf32> to vector<1x1x16x128xf32>
    tpu.vector_store %arg5[%c0_7, %c0_8, %c0_9, %c0_10], %12 {strides = array<i32>} : memref<1x1x16x128xf32, #tpu.memory_space<vmem>>, vector<1x1x16x128xf32>,
    return
  }
  func.func @transform_0(%arg0: i32, %arg1: i32) -> (i32, i32, i32, i32) {
    %c0_i32 = arith.constant 0 : i32
    %c0_i32_0 = arith.constant 0 : i32
    %c0_i32_1 = arith.constant 0 : i32
    return %arg0, %arg1, %c0_i32, %c0_i32_0 : i32, i32, i32, i32
  }
  func.func @transform_1(%arg0: i32, %arg1: i32) -> (i32, i32) {
    %c0_i32 = arith.constant 0 : i32
    %c0_i32_0 = arith.constant 0 : i32
    %c0_i32_1 = arith.constant 0 : i32
    return %c0_i32, %c0_i32_0 : i32, i32
  }
  func.func @transform_2(%arg0: i32, %arg1: i32) -> (i32, i32) {
    %c0_i32 = arith.constant 0 : i32
    %c0_i32_0 = arith.constant 0 : i32
    %c0_i32_1 = arith.constant 0 : i32
    return %c0_i32, %c0_i32_0 : i32, i32
  }
  func.func @transform_3(%arg0: i32, %arg1: i32) -> (i32, i32, i32, i32) {
    %c0_i32 = arith.constant 0 : i32
    %c0_i32_0 = arith.constant 0 : i32
    %c0_i32_1 = arith.constant 0 : i32
    return %arg0, %arg1, %c0_i32, %c0_i32_0 : i32, i32, i32, i32
  }
}

module attributes {stable_mosaic.version = 11 : i64} {
  func.func @_conv3_stats_kernel(%arg0: i32, %arg1: i32, %arg2: memref<1x1x16x24xf32, #tpu.memory_space<vmem>>, %arg3: memref<1x1x16x24xf32, #tpu.memory_space<vmem>>, %arg4: memref<1x1x16x24xf32, #tpu.memory_space<vmem>>, %arg5: memref<3x24x128xf32, #tpu.memory_space<vmem>>, %arg6: memref<1x128xf32, #tpu.memory_space<vmem>>, %arg7: memref<1x1x16x128xf32, #tpu.memory_space<vmem>>, %arg8: memref<1x8x128xf32, #tpu.memory_space<vmem>>) attributes {dimension_semantics = [#tpu.dimension_semantics<parallel>, #tpu.dimension_semantics<arbitrary>], iteration_bounds = array<i64: 2, 16>, scalar_prefetch = 0 : i64, scratch_operands = 0 : i64, tpu.core_type = #tpu.core_type<tc>, window_params = [{transform_indices = @transform_0, window_bounds = array<i64: 1, 1, 16, 24>}, {transform_indices = @transform_1, window_bounds = array<i64: 1, 1, 16, 24>}, {transform_indices = @transform_2, window_bounds = array<i64: 1, 1, 16, 24>}, {pipeline_mode = #tpu.pipeline_mode<synchronous>, transform_indices = @transform_3, window_bounds = array<i64: 3, 24, 128>}, {pipeline_mode = #tpu.pipeline_mode<synchronous>, transform_indices = @transform_4, window_bounds = array<i64: 1, 128>}, {transform_indices = @transform_5, window_bounds = array<i64: 1, 1, 16, 128>}, {transform_indices = @transform_6, window_bounds = array<i64: 1, 8, 128>}]} {
    %c0 = arith.constant 0 : index
    %c0_0 = arith.constant 0 : index
    %c0_1 = arith.constant 0 : index
    %c0_2 = arith.constant 0 : index
    %0 = vector.load %arg2[%c0, %c0_0, %c0_1, %c0_2] : memref<1x1x16x24xf32, #tpu.memory_space<vmem>>, vector<1x1x16x24xf32>
    %1 = vector.shape_cast %0 : vector<1x1x16x24xf32> to vector<16x24xf32>
    %c0_3 = arith.constant 0 : index
    %c0_4 = arith.constant 0 : index
    %c0_5 = arith.constant 0 : index
    %2 = vector.load %arg5[%c0_3, %c0_4, %c0_5] : memref<3x24x128xf32, #tpu.memory_space<vmem>>, vector<1x24x128xf32>
    %3 = vector.shape_cast %2 : vector<1x24x128xf32> to vector<24x128xf32>
    %cst = arith.constant dense<0.000000e+00> : vector<16x128xf32>
    %4 = tpu.matmul %1, %3, %cst {dimension_numbers = #tpu.dot_dimension_numbers<[1], [0], [0], [1], [0, 0, 1, 1], [], []>} : vector<16x24xf32>, vector<24x128xf32>, vector<16x128xf32> -> vector<16x128xf32>
    %c0_6 = arith.constant 0 : index
    %c0_7 = arith.constant 0 : index
    %c0_8 = arith.constant 0 : index
    %c0_9 = arith.constant 0 : index
    %5 = vector.load %arg3[%c0_6, %c0_7, %c0_8, %c0_9] : memref<1x1x16x24xf32, #tpu.memory_space<vmem>>, vector<1x1x16x24xf32>
    %6 = vector.shape_cast %5 : vector<1x1x16x24xf32> to vector<16x24xf32>
    %c1 = arith.constant 1 : index
    %c0_10 = arith.constant 0 : index
    %c0_11 = arith.constant 0 : index
    %7 = vector.load %arg5[%c1, %c0_10, %c0_11] : memref<3x24x128xf32, #tpu.memory_space<vmem>>, vector<1x24x128xf32>
    %8 = vector.shape_cast %7 : vector<1x24x128xf32> to vector<24x128xf32>
    %cst_12 = arith.constant dense<0.000000e+00> : vector<16x128xf32>
    %9 = tpu.matmul %6, %8, %cst_12 {dimension_numbers = #tpu.dot_dimension_numbers<[1], [0], [0], [1], [0, 0, 1, 1], [], []>} : vector<16x24xf32>, vector<24x128xf32>, vector<16x128xf32> -> vector<16x128xf32>
    %10 = arith.addf %4, %9 : vector<16x128xf32>
    %c0_13 = arith.constant 0 : index
    %c0_14 = arith.constant 0 : index
    %c0_15 = arith.constant 0 : index
    %c0_16 = arith.constant 0 : index
    %11 = vector.load %arg4[%c0_13, %c0_14, %c0_15, %c0_16] : memref<1x1x16x24xf32, #tpu.memory_space<vmem>>, vector<1x1x16x24xf32>
    %12 = vector.shape_cast %11 : vector<1x1x16x24xf32> to vector<16x24xf32>
    %c2 = arith.constant 2 : index
    %c0_17 = arith.constant 0 : index
    %c0_18 = arith.constant 0 : index
    %13 = vector.load %arg5[%c2, %c0_17, %c0_18] : memref<3x24x128xf32, #tpu.memory_space<vmem>>, vector<1x24x128xf32>
    %14 = vector.shape_cast %13 : vector<1x24x128xf32> to vector<24x128xf32>
    %cst_19 = arith.constant dense<0.000000e+00> : vector<16x128xf32>
    %15 = tpu.matmul %12, %14, %cst_19 {dimension_numbers = #tpu.dot_dimension_numbers<[1], [0], [0], [1], [0, 0, 1, 1], [], []>} : vector<16x24xf32>, vector<24x128xf32>, vector<16x128xf32> -> vector<16x128xf32>
    %16 = arith.addf %10, %15 : vector<16x128xf32>
    %c0_20 = arith.constant 0 : index
    %c0_21 = arith.constant 0 : index
    %17 = vector.load %arg6[%c0_20, %c0_21] : memref<1x128xf32, #tpu.memory_space<vmem>>, vector<1x128xf32>
    %18 = vector.broadcast %17 : vector<1x128xf32> to vector<16x128xf32>
    %19 = arith.addf %16, %18 : vector<16x128xf32>
    %c0_22 = arith.constant 0 : index
    %c0_23 = arith.constant 0 : index
    %c0_24 = arith.constant 0 : index
    %c0_25 = arith.constant 0 : index
    %20 = vector.load %arg7[%c0_22, %c0_23, %c0_24, %c0_25] : memref<1x1x16x128xf32, #tpu.memory_space<vmem>>, vector<1x1x16x128xf32>
    %21 = vector.shape_cast %20 : vector<1x1x16x128xf32> to vector<16x128xf32>
    %22 = vector.shape_cast %19 : vector<16x128xf32> to vector<1x1x16x128xf32>
    tpu.vector_store %arg7[%c0_22, %c0_23, %c0_24, %c0_25], %22 {strides = array<i32>} : memref<1x1x16x128xf32, #tpu.memory_space<vmem>>, vector<1x1x16x128xf32>,
    %c0_i32 = arith.constant 0 : i32
    %23 = arith.cmpi eq, %arg1, %c0_i32 : i32
    %24 = arith.extui %23 : i1 to i32
    %c0_i32_26 = arith.constant 0 : i32
    %25 = arith.cmpi ne, %24, %c0_i32_26 : i32
    scf.if %25 {
      %cst_41 = arith.constant 0.000000e+00 : f32
      %43 = vector.broadcast %cst_41 : f32 to vector<8x128xf32>
      %c0_42 = arith.constant 0 : index
      %c0_43 = arith.constant 0 : index
      %c0_44 = arith.constant 0 : index
      %44 = vector.load %arg8[%c0_42, %c0_43, %c0_44] : memref<1x8x128xf32, #tpu.memory_space<vmem>>, vector<1x8x128xf32>
      %45 = vector.shape_cast %44 : vector<1x8x128xf32> to vector<8x128xf32>
      %46 = vector.shape_cast %43 : vector<8x128xf32> to vector<1x8x128xf32>
      tpu.vector_store %arg8[%c0_42, %c0_43, %c0_44], %46 {strides = array<i32>} : memref<1x8x128xf32, #tpu.memory_space<vmem>>, vector<1x8x128xf32>,
    } else {
    }
    %c0_27 = arith.constant 0 : index
    %c0_28 = arith.constant 0 : index
    %c0_29 = arith.constant 0 : index
    %26 = vector.load %arg8[%c0_27, %c0_28, %c0_29] : memref<1x8x128xf32, #tpu.memory_space<vmem>>, vector<1x1x128xf32>
    %27 = vector.shape_cast %26 : vector<1x1x128xf32> to vector<1x128xf32>
    %cst_30 = arith.constant dense<0.000000e+00> : vector<128xf32>
    %28 = vector.multi_reduction <add>, %19, %cst_30 [0] : vector<16x128xf32> to vector<128xf32>
    %29 = vector.shape_cast %28 : vector<128xf32> to vector<1x128xf32>
    %30 = arith.addf %27, %29 : vector<1x128xf32>
    %c0_31 = arith.constant 0 : index
    %c0_32 = arith.constant 0 : index
    %c0_33 = arith.constant 0 : index
    %31 = vector.load %arg8[%c0_31, %c0_32, %c0_33] : memref<1x8x128xf32, #tpu.memory_space<vmem>>, vector<1x1x128xf32>
    %32 = vector.shape_cast %31 : vector<1x1x128xf32> to vector<1x128xf32>
    %33 = vector.shape_cast %30 : vector<1x128xf32> to vector<1x1x128xf32>
    tpu.vector_store %arg8[%c0_31, %c0_32, %c0_33], %33 {strides = array<i32>} : memref<1x8x128xf32, #tpu.memory_space<vmem>>, vector<1x1x128xf32>,
    %c0_34 = arith.constant 0 : index
    %c1_35 = arith.constant 1 : index
    %c0_36 = arith.constant 0 : index
    %34 = vector.load %arg8[%c0_34, %c1_35, %c0_36] : memref<1x8x128xf32, #tpu.memory_space<vmem>>, vector<1x1x128xf32>
    %35 = vector.shape_cast %34 : vector<1x1x128xf32> to vector<1x128xf32>
    %36 = arith.mulf %19, %19 : vector<16x128xf32>
    %cst_37 = arith.constant dense<0.000000e+00> : vector<128xf32>
    %37 = vector.multi_reduction <add>, %36, %cst_37 [0] : vector<16x128xf32> to vector<128xf32>
    %38 = vector.shape_cast %37 : vector<128xf32> to vector<1x128xf32>
    %39 = arith.addf %35, %38 : vector<1x128xf32>
    %c0_38 = arith.constant 0 : index
    %c1_39 = arith.constant 1 : index
    %c0_40 = arith.constant 0 : index
    %40 = vector.load %arg8[%c0_38, %c1_39, %c0_40] : memref<1x8x128xf32, #tpu.memory_space<vmem>>, vector<1x1x128xf32>
    %41 = vector.shape_cast %40 : vector<1x1x128xf32> to vector<1x128xf32>
    %42 = vector.shape_cast %39 : vector<1x128xf32> to vector<1x1x128xf32>
    tpu.vector_store %arg8[%c0_38, %c1_39, %c0_40], %42 {strides = array<i32>} : memref<1x8x128xf32, #tpu.memory_space<vmem>>, vector<1x1x128xf32>,
    return
  }
  func.func @transform_0(%arg0: i32, %arg1: i32) -> (i32, i32, i32, i32) {
    %c0_i32 = arith.constant 0 : i32
    %c0_i32_0 = arith.constant 0 : i32
    %c0_i32_1 = arith.constant 0 : i32
    return %arg0, %arg1, %c0_i32, %c0_i32_0 : i32, i32, i32, i32
  }
  func.func @transform_1(%arg0: i32, %arg1: i32) -> (i32, i32, i32, i32) {
    %c1_i32 = arith.constant 1 : i32
    %0 = arith.addi %arg1, %c1_i32 : i32
    %c0_i32 = arith.constant 0 : i32
    %c0_i32_0 = arith.constant 0 : i32
    %c0_i32_1 = arith.constant 0 : i32
    return %arg0, %0, %c0_i32, %c0_i32_0 : i32, i32, i32, i32
  }
  func.func @transform_2(%arg0: i32, %arg1: i32) -> (i32, i32, i32, i32) {
    %c2_i32 = arith.constant 2 : i32
    %0 = arith.addi %arg1, %c2_i32 : i32
    %c0_i32 = arith.constant 0 : i32
    %c0_i32_0 = arith.constant 0 : i32
    %c0_i32_1 = arith.constant 0 : i32
    return %arg0, %0, %c0_i32, %c0_i32_0 : i32, i32, i32, i32
  }
  func.func @transform_3(%arg0: i32, %arg1: i32) -> (i32, i32, i32) {
    %c0_i32 = arith.constant 0 : i32
    %c0_i32_0 = arith.constant 0 : i32
    %c0_i32_1 = arith.constant 0 : i32
    %c0_i32_2 = arith.constant 0 : i32
    return %c0_i32, %c0_i32_0, %c0_i32_1 : i32, i32, i32
  }
  func.func @transform_4(%arg0: i32, %arg1: i32) -> (i32, i32) {
    %c0_i32 = arith.constant 0 : i32
    %c0_i32_0 = arith.constant 0 : i32
    %c0_i32_1 = arith.constant 0 : i32
    return %c0_i32, %c0_i32_0 : i32, i32
  }
  func.func @transform_5(%arg0: i32, %arg1: i32) -> (i32, i32, i32, i32) {
    %c0_i32 = arith.constant 0 : i32
    %c0_i32_0 = arith.constant 0 : i32
    %c0_i32_1 = arith.constant 0 : i32
    return %arg0, %arg1, %c0_i32, %c0_i32_0 : i32, i32, i32, i32
  }
  func.func @transform_6(%arg0: i32, %arg1: i32) -> (i32, i32, i32) {
    %c0_i32 = arith.constant 0 : i32
    %c0_i32_0 = arith.constant 0 : i32
    %c0_i32_1 = arith.constant 0 : i32
    return %arg0, %c0_i32, %c0_i32_0 : i32, i32, i32
  }
}

module attributes {stable_mosaic.version = 11 : i64} {
  func.func @_conv3_stats_kernel(%arg0: i32, %arg1: i32, %arg2: memref<1x1x16x12xf32, #tpu.memory_space<vmem>>, %arg3: memref<1x1x16x12xf32, #tpu.memory_space<vmem>>, %arg4: memref<1x1x16x12xf32, #tpu.memory_space<vmem>>, %arg5: memref<3x12x128xf32, #tpu.memory_space<vmem>>, %arg6: memref<1x128xf32, #tpu.memory_space<vmem>>, %arg7: memref<1x1x16x128xf32, #tpu.memory_space<vmem>>, %arg8: memref<1x8x128xf32, #tpu.memory_space<vmem>>) attributes {dimension_semantics = [#tpu.dimension_semantics<parallel>, #tpu.dimension_semantics<arbitrary>], iteration_bounds = array<i64: 2, 16>, scalar_prefetch = 0 : i64, scratch_operands = 0 : i64, tpu.core_type = #tpu.core_type<tc>, window_params = [{transform_indices = @transform_0, window_bounds = array<i64: 1, 1, 16, 12>}, {transform_indices = @transform_1, window_bounds = array<i64: 1, 1, 16, 12>}, {transform_indices = @transform_2, window_bounds = array<i64: 1, 1, 16, 12>}, {pipeline_mode = #tpu.pipeline_mode<synchronous>, transform_indices = @transform_3, window_bounds = array<i64: 3, 12, 128>}, {pipeline_mode = #tpu.pipeline_mode<synchronous>, transform_indices = @transform_4, window_bounds = array<i64: 1, 128>}, {transform_indices = @transform_5, window_bounds = array<i64: 1, 1, 16, 128>}, {transform_indices = @transform_6, window_bounds = array<i64: 1, 8, 128>}]} {
    %c0 = arith.constant 0 : index
    %c0_0 = arith.constant 0 : index
    %c0_1 = arith.constant 0 : index
    %c0_2 = arith.constant 0 : index
    %0 = vector.load %arg2[%c0, %c0_0, %c0_1, %c0_2] : memref<1x1x16x12xf32, #tpu.memory_space<vmem>>, vector<1x1x16x12xf32>
    %1 = vector.shape_cast %0 : vector<1x1x16x12xf32> to vector<16x12xf32>
    %c0_3 = arith.constant 0 : index
    %c0_4 = arith.constant 0 : index
    %c0_5 = arith.constant 0 : index
    %2 = vector.load %arg5[%c0_3, %c0_4, %c0_5] : memref<3x12x128xf32, #tpu.memory_space<vmem>>, vector<1x12x128xf32>
    %3 = vector.shape_cast %2 : vector<1x12x128xf32> to vector<12x128xf32>
    %cst = arith.constant dense<0.000000e+00> : vector<16x128xf32>
    %4 = tpu.matmul %1, %3, %cst {dimension_numbers = #tpu.dot_dimension_numbers<[1], [0], [0], [1], [0, 0, 1, 1], [], []>} : vector<16x12xf32>, vector<12x128xf32>, vector<16x128xf32> -> vector<16x128xf32>
    %c0_6 = arith.constant 0 : index
    %c0_7 = arith.constant 0 : index
    %c0_8 = arith.constant 0 : index
    %c0_9 = arith.constant 0 : index
    %5 = vector.load %arg3[%c0_6, %c0_7, %c0_8, %c0_9] : memref<1x1x16x12xf32, #tpu.memory_space<vmem>>, vector<1x1x16x12xf32>
    %6 = vector.shape_cast %5 : vector<1x1x16x12xf32> to vector<16x12xf32>
    %c1 = arith.constant 1 : index
    %c0_10 = arith.constant 0 : index
    %c0_11 = arith.constant 0 : index
    %7 = vector.load %arg5[%c1, %c0_10, %c0_11] : memref<3x12x128xf32, #tpu.memory_space<vmem>>, vector<1x12x128xf32>
    %8 = vector.shape_cast %7 : vector<1x12x128xf32> to vector<12x128xf32>
    %cst_12 = arith.constant dense<0.000000e+00> : vector<16x128xf32>
    %9 = tpu.matmul %6, %8, %cst_12 {dimension_numbers = #tpu.dot_dimension_numbers<[1], [0], [0], [1], [0, 0, 1, 1], [], []>} : vector<16x12xf32>, vector<12x128xf32>, vector<16x128xf32> -> vector<16x128xf32>
    %10 = arith.addf %4, %9 : vector<16x128xf32>
    %c0_13 = arith.constant 0 : index
    %c0_14 = arith.constant 0 : index
    %c0_15 = arith.constant 0 : index
    %c0_16 = arith.constant 0 : index
    %11 = vector.load %arg4[%c0_13, %c0_14, %c0_15, %c0_16] : memref<1x1x16x12xf32, #tpu.memory_space<vmem>>, vector<1x1x16x12xf32>
    %12 = vector.shape_cast %11 : vector<1x1x16x12xf32> to vector<16x12xf32>
    %c2 = arith.constant 2 : index
    %c0_17 = arith.constant 0 : index
    %c0_18 = arith.constant 0 : index
    %13 = vector.load %arg5[%c2, %c0_17, %c0_18] : memref<3x12x128xf32, #tpu.memory_space<vmem>>, vector<1x12x128xf32>
    %14 = vector.shape_cast %13 : vector<1x12x128xf32> to vector<12x128xf32>
    %cst_19 = arith.constant dense<0.000000e+00> : vector<16x128xf32>
    %15 = tpu.matmul %12, %14, %cst_19 {dimension_numbers = #tpu.dot_dimension_numbers<[1], [0], [0], [1], [0, 0, 1, 1], [], []>} : vector<16x12xf32>, vector<12x128xf32>, vector<16x128xf32> -> vector<16x128xf32>
    %16 = arith.addf %10, %15 : vector<16x128xf32>
    %c0_20 = arith.constant 0 : index
    %c0_21 = arith.constant 0 : index
    %17 = vector.load %arg6[%c0_20, %c0_21] : memref<1x128xf32, #tpu.memory_space<vmem>>, vector<1x128xf32>
    %18 = vector.broadcast %17 : vector<1x128xf32> to vector<16x128xf32>
    %19 = arith.addf %16, %18 : vector<16x128xf32>
    %c0_22 = arith.constant 0 : index
    %c0_23 = arith.constant 0 : index
    %c0_24 = arith.constant 0 : index
    %c0_25 = arith.constant 0 : index
    %20 = vector.load %arg7[%c0_22, %c0_23, %c0_24, %c0_25] : memref<1x1x16x128xf32, #tpu.memory_space<vmem>>, vector<1x1x16x128xf32>
    %21 = vector.shape_cast %20 : vector<1x1x16x128xf32> to vector<16x128xf32>
    %22 = vector.shape_cast %19 : vector<16x128xf32> to vector<1x1x16x128xf32>
    tpu.vector_store %arg7[%c0_22, %c0_23, %c0_24, %c0_25], %22 {strides = array<i32>} : memref<1x1x16x128xf32, #tpu.memory_space<vmem>>, vector<1x1x16x128xf32>,
    %c0_i32 = arith.constant 0 : i32
    %23 = arith.cmpi eq, %arg1, %c0_i32 : i32
    %24 = arith.extui %23 : i1 to i32
    %c0_i32_26 = arith.constant 0 : i32
    %25 = arith.cmpi ne, %24, %c0_i32_26 : i32
    scf.if %25 {
      %cst_41 = arith.constant 0.000000e+00 : f32
      %43 = vector.broadcast %cst_41 : f32 to vector<8x128xf32>
      %c0_42 = arith.constant 0 : index
      %c0_43 = arith.constant 0 : index
      %c0_44 = arith.constant 0 : index
      %44 = vector.load %arg8[%c0_42, %c0_43, %c0_44] : memref<1x8x128xf32, #tpu.memory_space<vmem>>, vector<1x8x128xf32>
      %45 = vector.shape_cast %44 : vector<1x8x128xf32> to vector<8x128xf32>
      %46 = vector.shape_cast %43 : vector<8x128xf32> to vector<1x8x128xf32>
      tpu.vector_store %arg8[%c0_42, %c0_43, %c0_44], %46 {strides = array<i32>} : memref<1x8x128xf32, #tpu.memory_space<vmem>>, vector<1x8x128xf32>,
    } else {
    }
    %c0_27 = arith.constant 0 : index
    %c0_28 = arith.constant 0 : index
    %c0_29 = arith.constant 0 : index
    %26 = vector.load %arg8[%c0_27, %c0_28, %c0_29] : memref<1x8x128xf32, #tpu.memory_space<vmem>>, vector<1x1x128xf32>
    %27 = vector.shape_cast %26 : vector<1x1x128xf32> to vector<1x128xf32>
    %cst_30 = arith.constant dense<0.000000e+00> : vector<128xf32>
    %28 = vector.multi_reduction <add>, %19, %cst_30 [0] : vector<16x128xf32> to vector<128xf32>
    %29 = vector.shape_cast %28 : vector<128xf32> to vector<1x128xf32>
    %30 = arith.addf %27, %29 : vector<1x128xf32>
    %c0_31 = arith.constant 0 : index
    %c0_32 = arith.constant 0 : index
    %c0_33 = arith.constant 0 : index
    %31 = vector.load %arg8[%c0_31, %c0_32, %c0_33] : memref<1x8x128xf32, #tpu.memory_space<vmem>>, vector<1x1x128xf32>
    %32 = vector.shape_cast %31 : vector<1x1x128xf32> to vector<1x128xf32>
    %33 = vector.shape_cast %30 : vector<1x128xf32> to vector<1x1x128xf32>
    tpu.vector_store %arg8[%c0_31, %c0_32, %c0_33], %33 {strides = array<i32>} : memref<1x8x128xf32, #tpu.memory_space<vmem>>, vector<1x1x128xf32>,
    %c0_34 = arith.constant 0 : index
    %c1_35 = arith.constant 1 : index
    %c0_36 = arith.constant 0 : index
    %34 = vector.load %arg8[%c0_34, %c1_35, %c0_36] : memref<1x8x128xf32, #tpu.memory_space<vmem>>, vector<1x1x128xf32>
    %35 = vector.shape_cast %34 : vector<1x1x128xf32> to vector<1x128xf32>
    %36 = arith.mulf %19, %19 : vector<16x128xf32>
    %cst_37 = arith.constant dense<0.000000e+00> : vector<128xf32>
    %37 = vector.multi_reduction <add>, %36, %cst_37 [0] : vector<16x128xf32> to vector<128xf32>
    %38 = vector.shape_cast %37 : vector<128xf32> to vector<1x128xf32>
    %39 = arith.addf %35, %38 : vector<1x128xf32>
    %c0_38 = arith.constant 0 : index
    %c1_39 = arith.constant 1 : index
    %c0_40 = arith.constant 0 : index
    %40 = vector.load %arg8[%c0_38, %c1_39, %c0_40] : memref<1x8x128xf32, #tpu.memory_space<vmem>>, vector<1x1x128xf32>
    %41 = vector.shape_cast %40 : vector<1x1x128xf32> to vector<1x128xf32>
    %42 = vector.shape_cast %39 : vector<1x128xf32> to vector<1x1x128xf32>
    tpu.vector_store %arg8[%c0_38, %c1_39, %c0_40], %42 {strides = array<i32>} : memref<1x8x128xf32, #tpu.memory_space<vmem>>, vector<1x1x128xf32>,
    return
  }
  func.func @transform_0(%arg0: i32, %arg1: i32) -> (i32, i32, i32, i32) {
    %c0_i32 = arith.constant 0 : i32
    %c0_i32_0 = arith.constant 0 : i32
    %c0_i32_1 = arith.constant 0 : i32
    return %arg0, %arg1, %c0_i32, %c0_i32_0 : i32, i32, i32, i32
  }
  func.func @transform_1(%arg0: i32, %arg1: i32) -> (i32, i32, i32, i32) {
    %c1_i32 = arith.constant 1 : i32
    %0 = arith.addi %arg1, %c1_i32 : i32
    %c0_i32 = arith.constant 0 : i32
    %c0_i32_0 = arith.constant 0 : i32
    %c0_i32_1 = arith.constant 0 : i32
    return %arg0, %0, %c0_i32, %c0_i32_0 : i32, i32, i32, i32
  }
  func.func @transform_2(%arg0: i32, %arg1: i32) -> (i32, i32, i32, i32) {
    %c2_i32 = arith.constant 2 : i32
    %0 = arith.addi %arg1, %c2_i32 : i32
    %c0_i32 = arith.constant 0 : i32
    %c0_i32_0 = arith.constant 0 : i32
    %c0_i32_1 = arith.constant 0 : i32
    return %arg0, %0, %c0_i32, %c0_i32_0 : i32, i32, i32, i32
  }
  func.func @transform_3(%arg0: i32, %arg1: i32) -> (i32, i32, i32) {
    %c0_i32 = arith.constant 0 : i32
    %c0_i32_0 = arith.constant 0 : i32
    %c0_i32_1 = arith.constant 0 : i32
    %c0_i32_2 = arith.constant 0 : i32
    return %c0_i32, %c0_i32_0, %c0_i32_1 : i32, i32, i32
  }
  func.func @transform_4(%arg0: i32, %arg1: i32) -> (i32, i32) {
    %c0_i32 = arith.constant 0 : i32
    %c0_i32_0 = arith.constant 0 : i32
    %c0_i32_1 = arith.constant 0 : i32
    return %c0_i32, %c0_i32_0 : i32, i32
  }
  func.func @transform_5(%arg0: i32, %arg1: i32) -> (i32, i32, i32, i32) {
    %c0_i32 = arith.constant 0 : i32
    %c0_i32_0 = arith.constant 0 : i32
    %c0_i32_1 = arith.constant 0 : i32
    return %arg0, %arg1, %c0_i32, %c0_i32_0 : i32, i32, i32, i32
  }
  func.func @transform_6(%arg0: i32, %arg1: i32) -> (i32, i32, i32) {
    %c0_i32 = arith.constant 0 : i32
    %c0_i32_0 = arith.constant 0 : i32
    %c0_i32_1 = arith.constant 0 : i32
    return %arg0, %c0_i32, %c0_i32_0 : i32, i32, i32
  }
}

</mosaic_0001>

<llo_original>
// kernel: tile.8
$region0: #{tile.8}
  #allocation0 [shape = 's32[1]{0}', space=sflag, size = 0x4, scoped, tag = 'scoped memory for tile.8']
  %s0 = inlined_call_operand.vmem [shape: f32[4], index: 0, kind: input, shape index: {}]
  %s1 = inlined_call_operand.vmem [shape: f32[4,4], index: 1, kind: output, shape index: {}]
  // Predicated region
  $region2: #{tile.8} parent=0 // pred_check
    _
  $region3: #{tile.8} parent=0 // pred_check_branch
    %3 = sbr.rel (0) target = $region5
  $region4: #{tile.8} parent=0 // pred_region
    _
  $region5: #{tile.8} parent=0 // pred_fallthru
    _
  %v4 = vld [vmem:[%s0] ss:$0 sm:$0xff]
  %5 = vst [vmem:[%s1] sm:$0xf] %v4

// kernel: tile.9
$region0: #{tile.9}
  %s0 = inlined_call_operand.vmem [shape: f32[4,4], index: 0, kind: input, shape index: {}]
  %s1 = inlined_call_operand.vmem [shape: f32[16], index: 1, kind: output, shape index: {}]
  $region1: #{tile.9} parent=0
    #allocation0 [shape = 'u8[4096]{0}', space=vmem, size = 0x1000, scoped, tag = 'scoped mem for output reshape']
    #allocation1 [shape = 'u8[4096]{0}', space=vmem, size = 0x1000, scoped, tag = 'scoped mem for input reshape']
    %s3 = sshll.u32 1, 4
    %s4 = ssub.s32 %s3, 1
    %v5 = vld [vmem:[%s0] sm:%s4]
    %6 = vst [vmem:[#allocation1] sm:%s4] %v5
    %v7 = vld [vmem:[#allocation1] sm:$0x1]
    %vm8 = vcmask 31744
    %9 = vst.msk [vmem:[#allocation0] sm:$0x1] %vm8, %v7
    %s10 = scalar_lea.vmem [#allocation1], 3
    %v11 = vld [vmem:[%s10] sm:$0x1]
    %12 = vrot.lane.b32.xlu0 %v11, 12
    %v13 = vpop.permute.xlu0 %12
    %vm14 = vcmask 130144
    %15 = vst.msk [vmem:[#allocation0] sm:$0x1] %vm14, %v13
    %s16 = scalar_lea.vmem [#allocation1], 2
    %v17 = vld [vmem:[%s16] sm:$0x1]
    %18 = vrot.lane.b32.xlu0 %v17, 8
    %v19 = vpop.permute.xlu0 %18
    %vm20 = vcmask 97344
    %21 = vst.msk [vmem:[#allocation0] sm:$0x1] %vm20, %v19
    %s22 = scalar_lea.vmem [#allocation1], 1
    %v23 = vld [vmem:[%s22] sm:$0x1]
    %24 = vrot.lane.b32.xlu0 %v23, 4
    %v25 = vpop.permute.xlu0 %24
    %vm26 = vcmask 64544
    %27 = vst.msk [vmem:[#allocation0] sm:$0x1] %vm26, %v25
    %s29 = sshll.u32 1, 1
    %s30 = ssub.s32 %s29, 1
    %v32 = vld [vmem:[#allocation0] sm:%s30]
    %s33 = sshll.u32 1, 1
    %s34 = ssub.s32 %s33, 1
    %35 = vst [vmem:[%s1] sm:%s34] %v32

// kernel: up_forward.5
$region0: #{up_forward.5}
  #allocation0 [shape = 'u32[]', space=smem, size = 0x4, offset = 0x4, fixed_abs, tag = 'smem constant byte address 0x4 - core index']
  #allocation1 [shape = 'u32[144,128]{1,0:T(1,128)}', space=vmem, size = 0x12000, scoped, tag = 'internal scratch']
  %s0 = inlined_call_operand.vmem [shape: f32[2,8,8,8], index: 0, kind: input, shape index: {}]
  %s1 = inlined_call_operand.vmem [shape: f32[8,128], index: 1, kind: input, shape index: {}]
  %s2 = inlined_call_operand.vmem [shape: f32[1,128], index: 2, kind: input, shape index: {}]
  %s3 = inlined_call_operand.vmem [shape: f32[2,8,8,128], index: 3, kind: output, shape index: {}]
  %s4 = sld [smem:[#allocation0]]
  $region45: #{up_forward.5} parent=0
    _
  %s6 = ssub.s32 1, %s4
  %s7 = scalar_select 0, %s6, %s4
  loop: start=0, step=1, limit=18
  $region2: #{up_forward.5} parent=0 // loop_pre_header
    _
  $region3: #{up_forward.5} parent=0 // loop_header
    %s9 = sphi 0, %s13
    %p10 = scmp.ge.s32.totalorder %s9, 18
    %s16 = sphi 0, %s28
    %s17 = sphi 0, %s24
    %s18 = sphi 0, %s16
    %s19 = sphi 0, %s17
    %s20 = sphi 0, %s18
    %s21 = sphi 0, %s19
    %s33 = sphi 0, %s35
    %s36 = sphi 0, %s33
    %s37 = sphi 0, %s36
    %s53 = sphi 0, %s37
    %s57 = sphi 0, %s57
    %s59 = sphi 0, %s57
    %s60 = sphi 0, %s59
    %s74 = sphi 0, %s60
    %s78 = sphi 0, %s78
    %s80 = sphi 0, %s78
    %s81 = sphi 0, %s80
    %s95 = sphi 0, %s81
    %s103 = sphi 0, %s105
    %s106 = sphi 0, %s103
    %s107 = sphi 0, %s106
    %s123 = sphi 0, %s107
  $region4: #{up_forward.5} parent=0 // loop_header_branch
    %12 = sbr.rel (%p10) target = $region8
  $region5: #{up_forward.5} parent=0 // loop_body
    %s14 = ssub.s32 %s9, 1
    %s15 = ssub.s32 %s9, 2
    %s22 = sadd.s32 1, %s17
    %p23 = scmp.ge.s32.totalorder %s22, 8
    %s24 = scalar_select %p23, 0, %s22
    %s25 = sadd.s32 1, %s16
    %s26 = scalar_select %p23, %s25, %s16
    %p27 = scmp.ge.s32.totalorder %s26, 2
    %s28 = scalar_select %p27, 0, %s26
    %s29 = ssub.s32 %s16, %s28
    %s30 = ssub.s32 %s17, %s24
    %s31 = sor.u32 %s29, %s30
    %p32 = scmp.eq.s32.totalorder %s31, 0
    %s34 = sadd.s32 %s33, 1
    %s35 = scalar_select %p32, %s33, %s34
    %p38 = pneg %p32
    %p39 = scmp.eq.s32.totalorder %s9, 15
    %p40 = por %p38, %p39
    %p41 = scmp.ne.s32.totalorder %s33, %s36
    %p42 = scmp.eq.s32.totalorder %s9, 0
    %p43 = por %p41, %p42
    %p44 = scmp.ne.s32.totalorder %s33, %s36
    %p45 = scmp.eq.s32.totalorder %s14, 15
    %p46 = por %p44, %p45
    %p47 = scmp.ne.s32.totalorder %s36, %s37
    %p48 = scmp.eq.s32.totalorder %s14, 0
    %p49 = por %p47, %p48
    %p50 = scmp.ne.s32.totalorder %s36, %s37
    %p51 = scmp.eq.s32.totalorder %s15, 15
    %p52 = por %p50, %p51
    %p54 = scmp.ne.s32.totalorder %s37, %s53
    %p55 = scmp.eq.s32.totalorder %s15, 0
    %p56 = por %p54, %p55
    %s58 = sadd.s32 %s57, 1
    %p61 = scmp.eq.s32.totalorder %s9, 15
    %p62 = scmp.ne.s32.totalorder %s57, %s59
    %p63 = scmp.eq.s32.totalorder %s9, 0
    %p64 = por %p62, %p63
    %p65 = scmp.ne.s32.totalorder %s57, %s59
    %p66 = scmp.eq.s32.totalorder %s14, 15
    %p67 = por %p65, %p66
    %p68 = scmp.ne.s32.totalorder %s59, %s60
    %p69 = scmp.eq.s32.totalorder %s14, 0
    %p70 = por %p68, %p69
    %p71 = scmp.ne.s32.totalorder %s59, %s60
    %p72 = scmp.eq.s32.totalorder %s15, 15
    %p73 = por %p71, %p72
    %p75 = scmp.ne.s32.totalorder %s60, %s74
    %p76 = scmp.eq.s32.totalorder %s15, 0
    %p77 = por %p75, %p76
    %s79 = sadd.s32 %s78, 1
    %p82 = scmp.eq.s32.totalorder %s9, 15
    %p83 = scmp.ne.s32.totalorder %s78, %s80
    %p84 = scmp.eq.s32.totalorder %s9, 0
    %p85 = por %p83, %p84
    %p86 = scmp.ne.s32.totalorder %s78, %s80
    %p87 = scmp.eq.s32.totalorder %s14, 15
    %p88 = por %p86, %p87
    %p89 = scmp.ne.s32.totalorder %s80, %s81
    %p90 = scmp.eq.s32.totalorder %s14, 0
    %p91 = por %p89, %p90
    %p92 = scmp.ne.s32.totalorder %s80, %s81
    %p93 = scmp.eq.s32.totalorder %s15, 15
    %p94 = por %p92, %p93
    %p96 = scmp.ne.s32.totalorder %s81, %s95
    %p97 = scmp.eq.s32.totalorder %s15, 0
    %p98 = por %p96, %p97
    %s99 = ssub.s32 %s16, %s28
    %s100 = ssub.s32 %s17, %s24
    %s101 = sor.u32 %s99, %s100
    %p102 = scmp.eq.s32.totalorder %s101, 0
    %s104 = sadd.s32 %s103, 1
    %s105 = scalar_select %p102, %s103, %s104
    %p108 = pneg %p102
    %p109 = scmp.eq.s32.totalorder %s9, 15
    %p110 = por %p108, %p109
    %p111 = scmp.ne.s32.totalorder %s103, %s106
    %p112 = scmp.eq.s32.totalorder %s9, 0
    %p113 = por %p111, %p112
    %p114 = scmp.ne.s32.totalorder %s103, %s106
    %p115 = scmp.eq.s32.totalorder %s14, 15
    %p116 = por %p114, %p115
    %p117 = scmp.ne.s32.totalorder %s106, %s107
    %p118 = scmp.eq.s32.totalorder %s14, 0
    %p119 = por %p117, %p118
    %p120 = scmp.ne.s32.totalorder %s106, %s107
    %p121 = scmp.eq.s32.totalorder %s15, 15
    %p122 = por %p120, %p121
    %p124 = scmp.ne.s32.totalorder %s107, %s123
    %p125 = scmp.eq.s32.totalorder %s15, 0
    %p126 = por %p124, %p125
    %p127 = scmp.le.s32.totalorder 1, %s9
    %p128 = scmp.lt.s32.totalorder %s9, 17
    %p129 = pnand %p127, %p128
    %p130 = pneg %p129
    // Predicated region
    $region9: #{up_forward.5} parent=5 // pred_check
      _
    $region10: #{up_forward.5} parent=5 // pred_check_branch
      %132 = sbr.rel (%p129) target = $region12
    $region11: #{up_forward.5} parent=5 // pred_region
      %s133 = ssub.s32 %s9, 1
      // Predicated region
      $region13: #{up_forward.5} parent=11 // pred_check
        %p134 = pneg %p70
      $region14: #{up_forward.5} parent=11 // pred_check_branch
        %136 = sbr.rel (%p134) target = $region16
      $region15: #{up_forward.5} parent=11 // pred_region
        _
      $region16: #{up_forward.5} parent=11 // pred_fallthru
        _
      // Predicated region
      $region17: #{up_forward.5} parent=11 // pred_check
        %p137 = pneg %p91
      $region18: #{up_forward.5} parent=11 // pred_check_branch
        %139 = sbr.rel (%p137) target = $region20
      $region19: #{up_forward.5} parent=11 // pred_region
        _
      $region20: #{up_forward.5} parent=11 // pred_fallthru
        _
    $region12: #{up_forward.5} parent=5 // pred_fallthru
      _
    %p140 = scmp.lt.s32.totalorder %s9, 16
    // Predicated region
    $region21: #{up_forward.5} parent=5 // pred_check
      %p141 = pneg %p140
    $region22: #{up_forward.5} parent=5 // pred_check_branch
      %143 = sbr.rel (%p141) target = $region24
    $region23: #{up_forward.5} parent=5 // pred_region
      // Predicated region
      $region25: #{up_forward.5} parent=23 // pred_check
        %p144 = pneg %p43
      $region26: #{up_forward.5} parent=23 // pred_check_branch
        %146 = sbr.rel (%p144) target = $region28
      $region27: #{up_forward.5} parent=23 // pred_region
        %p147 = scmp.lt.s32.totalorder %s16, 1
        %s148 = scalar_select %p147, %s16, 1
        %p149 = scmp.lt.s32.totalorder %s17, 7
        %s150 = scalar_select %p149, %s17, 7
        %s151 = smul.addr %s148, 8
        %s152 = sadd.s32 %s150, %s151
        %s153 = smul.addr %s152, 8
        %s154 = scalar_lea.vmem %s0, %s153
      $region28: #{up_forward.5} parent=23 // pred_fallthru
        _
    $region24: #{up_forward.5} parent=5 // pred_fallthru
      _
    %p155 = scmp.le.s32.totalorder 1, %s9
    %p156 = scmp.lt.s32.totalorder %s9, 17
    %p157 = pnand %p155, %p156
    %p158 = pneg %p157
    // Predicated region
    $region29: #{up_forward.5} parent=5 // pred_check
      _
    $region30: #{up_forward.5} parent=5 // pred_check_branch
      %160 = sbr.rel (%p157) target = $region32
    $region31: #{up_forward.5} parent=5 // pred_region
      %s161 = ssub.s32 %s9, 1
      %p162 = scmp.lt.s32.totalorder %s18, 1
      %s163 = scalar_select %p162, %s18, 1
      %p164 = scmp.lt.s32.totalorder %s19, 7
      %s165 = scalar_select %p164, %s19, 7
      %s166 = smul.addr %s163, 8
      %s167 = sadd.s32 %s165, %s166
      %s168 = smul.addr %s167, 8
      %s169 = scalar_lea.vmem %s0, %s168
      %p170 = pneg %p49
      %p171 = pneg %p46
      %p172 = pneg %p70
      %p173 = pneg %p67
      %p174 = pneg %p91
      %p175 = pneg %p88
      %p176 = pneg %p119
      %p177 = pneg %p116
      %p178 = scmp.lt.s32.totalorder %s18, 1
      %s179 = scalar_select %p178, %s18, 1
      %p180 = scmp.lt.s32.totalorder %s19, 7
      %s181 = scalar_select %p180, %s19, 7
      %s182 = smul.addr %s179, 8
      %s183 = sadd.s32 %s181, %s182
      %s184 = smul.addr %s183, 8
      %s185 = scalar_lea.vmem %s3, %s184
      %p186 = scmp.lt.s32.totalorder %s18, 1
      %s187 = scalar_select %p186, %s18, 1
      %p188 = scmp.lt.s32.totalorder %s19, 7
      %s189 = scalar_select %p188, %s19, 7
      %s190 = smul.addr %s187, 8
      %s191 = sadd.s32 %s189, %s190
      %s192 = smul.addr %s191, 8
      %s193 = scalar_lea.vmem %s0, %s192
      %p194 = scmp.lt.s32.totalorder %s18, 1
      %s195 = scalar_select %p194, %s18, 1
      %p196 = scmp.lt.s32.totalorder %s19, 7
      %s197 = scalar_select %p196, %s19, 7
      %s198 = smul.addr %s195, 8
      %s199 = sadd.s32 %s197, %s198
      %s200 = smul.addr %s199, 8
      %s201 = scalar_lea.vmem %s3, %s200
      %v202 = vld [vmem:[%s193] sm:$0xff]
      %v203 = vld [vmem:[%s1] sm:$0xff]
      %v204 = vld [vmem:[%s2] sm:$0x1]
      %v206 = vlaneseq
      %v207 = vshrl.u32 %v206, 7
      %v208 = vsub.s32 0, %v207
      %v209 = vrot.slane %v204, %v208
      %vm211 = vcmask 64512
      %v213 = vsel %vm211, %v202, 0
      %215 = vmatprep.subr.mxu0 0.0
      %216 = vmatpush1.msra.mxu0 0.0
      %217 = vmatprep.subr.mxu0 0.0
      %218 = vmatpush1.msra.mxu0 0.0
      %219 = vmatprep.subr.mxu0 0.0
      %220 = vmatpush1.msra.mxu0 0.0
      %221 = vmatprep.subr.mxu0 0.0
      %222 = vmatpush1.msra.mxu0 0.0
      %223 = vmatprep.subr.mxu0 0.0
      %224 = vmatpush1.msra.mxu0 0.0
      %225 = vmatprep.subr.mxu0 0.0
      %226 = vmatpush1.msra.mxu0 0.0
      %227 = vmatprep.subr.mxu0 0.0
      %228 = vmatpush1.msra.mxu0 0.0
      %229 = vmatprep.subr.mxu0 0.0
      %230 = vmatpush1.msra.mxu0 0.0
      %231 = vmatprep.subr.mxu0 0.0
      %232 = vmatpush1.msra.mxu0 0.0
      %233 = vmatprep.subr.mxu0 0.0
      %234 = vmatpush1.msra.mxu0 0.0
      %235 = vmatprep.subr.mxu0 0.0
      %236 = vmatpush1.msra.mxu0 0.0
      %237 = vmatprep.subr.mxu0 0.0
      %238 = vmatpush1.msra.mxu0 0.0
      %239 = vmatprep.subr.mxu0 0.0
      %240 = vmatpush1.msra.mxu0 0.0
      %241 = vmatprep.subr.mxu0 0.0
      %242 = vmatpush1.msra.mxu0 0.0
      %243 = vmatprep.subr.mxu0 0.0
      %244 = vmatpush1.msra.mxu0 0.0
      %245 = vmatprep.subr.mxu0 0.0
      %246 = vmatpush1.msra.mxu0 %v203
      %247 = vmatprep.subr.mxu0 0.0
      %248 = vmatpush2.msra.mxu0 0.0
      %249 = vmatprep.subr.mxu0 0.0
      %250 = vmatpush2.msra.mxu0 0.0
      %251 = vmatprep.subr.mxu0 0.0
      %252 = vmatpush2.msra.mxu0 0.0
      %253 = vmatprep.subr.mxu0 0.0
      %254 = vmatpush2.msra.mxu0 0.0
      %255 = vmatprep.subr.mxu0 0.0
      %256 = vmatpush2.msra.mxu0 0.0
      %257 = vmatprep.subr.mxu0 0.0
      %258 = vmatpush2.msra.mxu0 0.0
      %259 = vmatprep.subr.mxu0 0.0
      %260 = vmatpush2.msra.mxu0 0.0
      %261 = vmatprep.subr.mxu0 0.0
      %262 = vmatpush2.msra.mxu0 0.0
      %263 = vmatprep.subr.mxu0 0.0
      %264 = vmatpush2.msra.mxu0 0.0
      %265 = vmatprep.subr.mxu0 0.0
      %266 = vmatpush2.msra.mxu0 0.0
      %267 = vmatprep.subr.mxu0 0.0
      %268 = vmatpush2.msra.mxu0 0.0
      %269 = vmatprep.subr.mxu0 0.0
      %270 = vmatpush2.msra.mxu0 0.0
      %271 = vmatprep.subr.mxu0 0.0
      %272 = vmatpush2.msra.mxu0 0.0
      %273 = vmatprep.subr.mxu0 0.0
      %274 = vmatpush2.msra.mxu0 0.0
      %275 = vmatprep.subr.mxu0 0.0
      %276 = vmatpush2.msra.mxu0 0.0
      %277 = vmatprep.subr.mxu0 0.0
      %278 = vmatpush2.msra.mxu0 0.0
      %279 = vmatprep.mubr.f32.mxu0 0.0
      %280 = vmatmul.mubr.f32.gmra.mxu0 %v213
      %v281 = vpop.f32.mrf.mxu0
      %v282 = vadd.f32 %v209, %v281
      %v283 = vpop.f32.mrf.mxu0
      %284 = vdwg.mxu0
      %285 = vst [vmem:[%s201] sm:$0xff] %v282
      %p286 = scmp.lt.s32.totalorder %s18, 1
      %s287 = scalar_select %p286, %s18, 1
      %p288 = scmp.lt.s32.totalorder %s19, 7
      %s289 = scalar_select %p288, %s19, 7
      %s290 = smul.addr %s287, 8
      %s291 = sadd.s32 %s289, %s290
      %s292 = smul.addr %s291, 8
      %s293 = scalar_lea.vmem %s3, %s292
      // Predicated region
      $region33: #{up_forward.5} parent=31 // pred_check
        %p294 = pneg %p116
      $region34: #{up_forward.5} parent=31 // pred_check_branch
        %296 = sbr.rel (%p294) target = $region36
      $region35: #{up_forward.5} parent=31 // pred_region
        _
      $region36: #{up_forward.5} parent=31 // pred_fallthru
        _
    $region32: #{up_forward.5} parent=5 // pred_fallthru
      _
    %p297 = scmp.le.s32.totalorder 2, %s9
    // Predicated region
    $region37: #{up_forward.5} parent=5 // pred_check
      %p298 = pneg %p297
    $region38: #{up_forward.5} parent=5 // pred_check_branch
      %300 = sbr.rel (%p298) target = $region40
    $region39: #{up_forward.5} parent=5 // pred_region
      %s301 = ssub.s32 %s9, 2
      // Predicated region
      $region41: #{up_forward.5} parent=39 // pred_check
        %p302 = pneg %p122
      $region42: #{up_forward.5} parent=39 // pred_check_branch
        %304 = sbr.rel (%p302) target = $region44
      $region43: #{up_forward.5} parent=39 // pred_region
        %p305 = scmp.lt.s32.totalorder %s20, 1
        %s306 = scalar_select %p305, %s20, 1
        %p307 = scmp.lt.s32.totalorder %s21, 7
        %s308 = scalar_select %p307, %s21, 7
        %s309 = smul.addr %s306, 8
        %s310 = sadd.s32 %s308, %s309
        %s311 = smul.addr %s310, 8
        %s312 = scalar_lea.vmem %s3, %s311
      $region44: #{up_forward.5} parent=39 // pred_fallthru
        _
    $region40: #{up_forward.5} parent=5 // pred_fallthru
      _
  $region6: #{up_forward.5} parent=0 // loop_footer
    %s13 = sadd.s32 1, %s9
  $region7: #{up_forward.5} parent=0 // loop_footer_branch
    %8 = sbr.rel target = $region3
  $region8: #{up_forward.5} parent=0 // loop_exit
    _

// kernel: up_forward.7
$region0: #{up_forward.7}
  #allocation0 [shape = 'u32[]', space=smem, size = 0x4, offset = 0x4, fixed_abs, tag = 'smem constant byte address 0x4 - core index']
  #allocation1 [shape = 'u32[144,128]{1,0:T(1,128)}', space=vmem, size = 0x12000, scoped, tag = 'internal scratch']
  %s0 = inlined_call_operand.vmem [shape: f32[2,16,16,128], index: 0, kind: input, shape index: {}]
  %s1 = inlined_call_operand.vmem [shape: f32[1,128], index: 1, kind: input, shape index: {}]
  %s2 = inlined_call_operand.vmem [shape: f32[1,128], index: 2, kind: input, shape index: {}]
  %s3 = inlined_call_operand.vmem [shape: f32[2,16,16,128], index: 3, kind: output, shape index: {}]
  %s4 = sld [smem:[#allocation0]]
  $region45: #{up_forward.7} parent=0
    _
  %s6 = ssub.s32 1, %s4
  %s7 = scalar_select 0, %s6, %s4
  loop: start=0, step=1, limit=34
  $region2: #{up_forward.7} parent=0 // loop_pre_header
    _
  $region3: #{up_forward.7} parent=0 // loop_header
    %s9 = sphi 0, %s13
    %p10 = scmp.ge.s32.totalorder %s9, 34
    %s16 = sphi 0, %s28
    %s17 = sphi 0, %s24
    %s18 = sphi 0, %s16
    %s19 = sphi 0, %s17
    %s20 = sphi 0, %s18
    %s21 = sphi 0, %s19
    %s33 = sphi 0, %s35
    %s36 = sphi 0, %s33
    %s37 = sphi 0, %s36
    %s53 = sphi 0, %s37
    %s57 = sphi 0, %s57
    %s59 = sphi 0, %s57
    %s60 = sphi 0, %s59
    %s74 = sphi 0, %s60
    %s78 = sphi 0, %s78
    %s80 = sphi 0, %s78
    %s81 = sphi 0, %s80
    %s95 = sphi 0, %s81
    %s103 = sphi 0, %s105
    %s106 = sphi 0, %s103
    %s107 = sphi 0, %s106
    %s123 = sphi 0, %s107
  $region4: #{up_forward.7} parent=0 // loop_header_branch
    %12 = sbr.rel (%p10) target = $region8
  $region5: #{up_forward.7} parent=0 // loop_body
    %s14 = ssub.s32 %s9, 1
    %s15 = ssub.s32 %s9, 2
    %s22 = sadd.s32 1, %s17
    %p23 = scmp.ge.s32.totalorder %s22, 16
    %s24 = scalar_select %p23, 0, %s22
    %s25 = sadd.s32 1, %s16
    %s26 = scalar_select %p23, %s25, %s16
    %p27 = scmp.ge.s32.totalorder %s26, 2
    %s28 = scalar_select %p27, 0, %s26
    %s29 = ssub.s32 %s16, %s28
    %s30 = ssub.s32 %s17, %s24
    %s31 = sor.u32 %s29, %s30
    %p32 = scmp.eq.s32.totalorder %s31, 0
    %s34 = sadd.s32 %s33, 1
    %s35 = scalar_select %p32, %s33, %s34
    %p38 = pneg %p32
    %p39 = scmp.eq.s32.totalorder %s9, 31
    %p40 = por %p38, %p39
    %p41 = scmp.ne.s32.totalorder %s33, %s36
    %p42 = scmp.eq.s32.totalorder %s9, 0
    %p43 = por %p41, %p42
    %p44 = scmp.ne.s32.totalorder %s33, %s36
    %p45 = scmp.eq.s32.totalorder %s14, 31
    %p46 = por %p44, %p45
    %p47 = scmp.ne.s32.totalorder %s36, %s37
    %p48 = scmp.eq.s32.totalorder %s14, 0
    %p49 = por %p47, %p48
    %p50 = scmp.ne.s32.totalorder %s36, %s37
    %p51 = scmp.eq.s32.totalorder %s15, 31
    %p52 = por %p50, %p51
    %p54 = scmp.ne.s32.totalorder %s37, %s53
    %p55 = scmp.eq.s32.totalorder %s15, 0
    %p56 = por %p54, %p55
    %s58 = sadd.s32 %s57, 1
    %p61 = scmp.eq.s32.totalorder %s9, 31
    %p62 = scmp.ne.s32.totalorder %s57, %s59
    %p63 = scmp.eq.s32.totalorder %s9, 0
    %p64 = por %p62, %p63
    %p65 = scmp.ne.s32.totalorder %s57, %s59
    %p66 = scmp.eq.s32.totalorder %s14, 31
    %p67 = por %p65, %p66
    %p68 = scmp.ne.s32.totalorder %s59, %s60
    %p69 = scmp.eq.s32.totalorder %s14, 0
    %p70 = por %p68, %p69
    %p71 = scmp.ne.s32.totalorder %s59, %s60
    %p72 = scmp.eq.s32.totalorder %s15, 31
    %p73 = por %p71, %p72
    %p75 = scmp.ne.s32.totalorder %s60, %s74
    %p76 = scmp.eq.s32.totalorder %s15, 0
    %p77 = por %p75, %p76
    %s79 = sadd.s32 %s78, 1
    %p82 = scmp.eq.s32.totalorder %s9, 31
    %p83 = scmp.ne.s32.totalorder %s78, %s80
    %p84 = scmp.eq.s32.totalorder %s9, 0
    %p85 = por %p83, %p84
    %p86 = scmp.ne.s32.totalorder %s78, %s80
    %p87 = scmp.eq.s32.totalorder %s14, 31
    %p88 = por %p86, %p87
    %p89 = scmp.ne.s32.totalorder %s80, %s81
    %p90 = scmp.eq.s32.totalorder %s14, 0
    %p91 = por %p89, %p90
    %p92 = scmp.ne.s32.totalorder %s80, %s81
    %p93 = scmp.eq.s32.totalorder %s15, 31
    %p94 = por %p92, %p93
    %p96 = scmp.ne.s32.totalorder %s81, %s95
    %p97 = scmp.eq.s32.totalorder %s15, 0
    %p98 = por %p96, %p97
    %s99 = ssub.s32 %s16, %s28
    %s100 = ssub.s32 %s17, %s24
    %s101 = sor.u32 %s99, %s100
    %p102 = scmp.eq.s32.totalorder %s101, 0
    %s104 = sadd.s32 %s103, 1
    %s105 = scalar_select %p102, %s103, %s104
    %p108 = pneg %p102
    %p109 = scmp.eq.s32.totalorder %s9, 31
    %p110 = por %p108, %p109
    %p111 = scmp.ne.s32.totalorder %s103, %s106
    %p112 = scmp.eq.s32.totalorder %s9, 0
    %p113 = por %p111, %p112
    %p114 = scmp.ne.s32.totalorder %s103, %s106
    %p115 = scmp.eq.s32.totalorder %s14, 31
    %p116 = por %p114, %p115
    %p117 = scmp.ne.s32.totalorder %s106, %s107
    %p118 = scmp.eq.s32.totalorder %s14, 0
    %p119 = por %p117, %p118
    %p120 = scmp.ne.s32.totalorder %s106, %s107
    %p121 = scmp.eq.s32.totalorder %s15, 31
    %p122 = por %p120, %p121
    %p124 = scmp.ne.s32.totalorder %s107, %s123
    %p125 = scmp.eq.s32.totalorder %s15, 0
    %p126 = por %p124, %p125
    %p127 = scmp.le.s32.totalorder 1, %s9
    %p128 = scmp.lt.s32.totalorder %s9, 33
    %p129 = pnand %p127, %p128
    %p130 = pneg %p129
    // Predicated region
    $region9: #{up_forward.7} parent=5 // pred_check
      _
    $region10: #{up_forward.7} parent=5 // pred_check_branch
      %132 = sbr.rel (%p129) target = $region12
    $region11: #{up_forward.7} parent=5 // pred_region
      %s133 = ssub.s32 %s9, 1
      // Predicated region
      $region13: #{up_forward.7} parent=11 // pred_check
        %p134 = pneg %p70
      $region14: #{up_forward.7} parent=11 // pred_check_branch
        %136 = sbr.rel (%p134) target = $region16
      $region15: #{up_forward.7} parent=11 // pred_region
        _
      $region16: #{up_forward.7} parent=11 // pred_fallthru
        _
      // Predicated region
      $region17: #{up_forward.7} parent=11 // pred_check
        %p137 = pneg %p91
      $region18: #{up_forward.7} parent=11 // pred_check_branch
        %139 = sbr.rel (%p137) target = $region20
      $region19: #{up_forward.7} parent=11 // pred_region
        _
      $region20: #{up_forward.7} parent=11 // pred_fallthru
        _
    $region12: #{up_forward.7} parent=5 // pred_fallthru
      _
    %p140 = scmp.lt.s32.totalorder %s9, 32
    // Predicated region
    $region21: #{up_forward.7} parent=5 // pred_check
      %p141 = pneg %p140
    $region22: #{up_forward.7} parent=5 // pred_check_branch
      %143 = sbr.rel (%p141) target = $region24
    $region23: #{up_forward.7} parent=5 // pred_region
      // Predicated region
      $region25: #{up_forward.7} parent=23 // pred_check
        %p144 = pneg %p43
      $region26: #{up_forward.7} parent=23 // pred_check_branch
        %146 = sbr.rel (%p144) target = $region28
      $region27: #{up_forward.7} parent=23 // pred_region
        %p147 = scmp.lt.s32.totalorder %s16, 1
        %s148 = scalar_select %p147, %s16, 1
        %p149 = scmp.lt.s32.totalorder %s17, 15
        %s150 = scalar_select %p149, %s17, 15
        %s151 = smul.addr %s150, 2
        %s152 = smul.addr %s148, 32
        %s153 = sadd.s32 %s151, %s152
        %s154 = smul.addr %s153, 8
        %s155 = scalar_lea.vmem %s0, %s154
      $region28: #{up_forward.7} parent=23 // pred_fallthru
        _
    $region24: #{up_forward.7} parent=5 // pred_fallthru
      _
    %p156 = scmp.le.s32.totalorder 1, %s9
    %p157 = scmp.lt.s32.totalorder %s9, 33
    %p158 = pnand %p156, %p157
    %p159 = pneg %p158
    // Predicated region
    $region29: #{up_forward.7} parent=5 // pred_check
      _
    $region30: #{up_forward.7} parent=5 // pred_check_branch
      %161 = sbr.rel (%p158) target = $region32
    $region31: #{up_forward.7} parent=5 // pred_region
      %s162 = ssub.s32 %s9, 1
      %p163 = scmp.lt.s32.totalorder %s18, 1
      %s164 = scalar_select %p163, %s18, 1
      %p165 = scmp.lt.s32.totalorder %s19, 15
      %s166 = scalar_select %p165, %s19, 15
      %s167 = smul.addr %s166, 2
      %s168 = smul.addr %s164, 32
      %s169 = sadd.s32 %s167, %s168
      %s170 = smul.addr %s169, 8
      %s171 = scalar_lea.vmem %s0, %s170
      %p172 = pneg %p49
      %p173 = pneg %p46
      %p174 = pneg %p70
      %p175 = pneg %p67
      %p176 = pneg %p91
      %p177 = pneg %p88
      %p178 = pneg %p119
      %p179 = pneg %p116
      %p180 = scmp.lt.s32.totalorder %s18, 1
      %s181 = scalar_select %p180, %s18, 1
      %p182 = scmp.lt.s32.totalorder %s19, 15
      %s183 = scalar_select %p182, %s19, 15
      %s184 = smul.addr %s183, 2
      %s185 = smul.addr %s181, 32
      %s186 = sadd.s32 %s184, %s185
      %s187 = smul.addr %s186, 8
      %s188 = scalar_lea.vmem %s3, %s187
      %p189 = scmp.lt.s32.totalorder %s18, 1
      %s190 = scalar_select %p189, %s18, 1
      %p191 = scmp.lt.s32.totalorder %s19, 15
      %s192 = scalar_select %p191, %s19, 15
      %s193 = smul.addr %s192, 2
      %s194 = smul.addr %s190, 32
      %s195 = sadd.s32 %s193, %s194
      %s196 = smul.addr %s195, 8
      %s197 = scalar_lea.vmem %s0, %s196
      %p198 = scmp.lt.s32.totalorder %s18, 1
      %s199 = scalar_select %p198, %s18, 1
      %p200 = scmp.lt.s32.totalorder %s19, 15
      %s201 = scalar_select %p200, %s19, 15
      %s202 = smul.addr %s201, 2
      %s203 = smul.addr %s199, 32
      %s204 = sadd.s32 %s202, %s203
      %s205 = smul.addr %s204, 8
      %s206 = scalar_lea.vmem %s3, %s205
      %v207 = vld [vmem:[%s197] sm:$0xff]
      %v208 = vld [vmem:[%s197 + $0x8] sm:$0xff]
      %v209 = vld [vmem:[%s1] sm:$0x1]
      %v211 = vlaneseq
      %v212 = vshrl.u32 %v211, 7
      %v213 = vsub.s32 0, %v212
      %v214 = vrot.slane %v209, %v213
      %v216 = vmul.f32 %v207, %v214
      %v217 = vmul.f32 %v208, %v214
      %v218 = vld [vmem:[%s2] sm:$0x1]
      %v220 = vlaneseq
      %v221 = vshrl.u32 %v220, 7
      %v222 = vsub.s32 0, %v221
      %v223 = vrot.slane %v218, %v222
      %v225 = vadd.f32 %v216, %v223
      %v226 = vadd.f32 %v217, %v223
      %v227 = vmax.f32 %v225, 0.0
      %v228 = vmax.f32 %v226, 0.0
      %229 = vst [vmem:[%s206] sm:$0xff] %v227
      %230 = vst [vmem:[%s206 + $0x8] sm:$0xff] %v228
      %p231 = scmp.lt.s32.totalorder %s18, 1
      %s232 = scalar_select %p231, %s18, 1
      %p233 = scmp.lt.s32.totalorder %s19, 15
      %s234 = scalar_select %p233, %s19, 15
      %s235 = smul.addr %s234, 2
      %s236 = smul.addr %s232, 32
      %s237 = sadd.s32 %s235, %s236
      %s238 = smul.addr %s237, 8
      %s239 = scalar_lea.vmem %s3, %s238
      // Predicated region
      $region33: #{up_forward.7} parent=31 // pred_check
        %p240 = pneg %p116
      $region34: #{up_forward.7} parent=31 // pred_check_branch
        %242 = sbr.rel (%p240) target = $region36
      $region35: #{up_forward.7} parent=31 // pred_region
        _
      $region36: #{up_forward.7} parent=31 // pred_fallthru
        _
    $region32: #{up_forward.7} parent=5 // pred_fallthru
      _
    %p243 = scmp.le.s32.totalorder 2, %s9
    // Predicated region
    $region37: #{up_forward.7} parent=5 // pred_check
      %p244 = pneg %p243
    $region38: #{up_forward.7} parent=5 // pred_check_branch
      %246 = sbr.rel (%p244) target = $region40
    $region39: #{up_forward.7} parent=5 // pred_region
      %s247 = ssub.s32 %s9, 2
      // Predicated region
      $region41: #{up_forward.7} parent=39 // pred_check
        %p248 = pneg %p122
      $region42: #{up_forward.7} parent=39 // pred_check_branch
        %250 = sbr.rel (%p248) target = $region44
      $region43: #{up_forward.7} parent=39 // pred_region
        %p251 = scmp.lt.s32.totalorder %s20, 1
        %s252 = scalar_select %p251, %s20, 1
        %p253 = scmp.lt.s32.totalorder %s21, 15
        %s254 = scalar_select %p253, %s21, 15
        %s255 = smul.addr %s254, 2
        %s256 = smul.addr %s252, 32
        %s257 = sadd.s32 %s255, %s256
        %s258 = smul.addr %s257, 8
        %s259 = scalar_lea.vmem %s3, %s258
      $region44: #{up_forward.7} parent=39 // pred_fallthru
        _
    $region40: #{up_forward.7} parent=5 // pred_fallthru
      _
  $region6: #{up_forward.7} parent=0 // loop_footer
    %s13 = sadd.s32 1, %s9
  $region7: #{up_forward.7} parent=0 // loop_footer_branch
    %8 = sbr.rel target = $region3
  $region8: #{up_forward.7} parent=0 // loop_exit
    _

// kernel: up_forward.6
$region0: #{up_forward.6}
  #allocation0 [shape = 'u32[]', space=smem, size = 0x4, offset = 0x4, fixed_abs, tag = 'smem constant byte address 0x4 - core index']
  #allocation1 [shape = 'u32[144,128]{1,0:T(1,128)}', space=vmem, size = 0x12000, scoped, tag = 'internal scratch']
  %s0 = inlined_call_operand.vmem [shape: f32[2,18,16,24], index: 0, kind: input, shape index: {}, may-alias: {0,1,2}]
  %s1 = inlined_call_operand.vmem [shape: f32[2,18,16,24], index: 1, kind: input, shape index: {}, may-alias: {0,1,2}]
  %s2 = inlined_call_operand.vmem [shape: f32[2,18,16,24], index: 2, kind: input, shape index: {}, may-alias: {0,1,2}]
  %s3 = inlined_call_operand.vmem [shape: f32[3,24,128], index: 3, kind: input, shape index: {}]
  %s4 = inlined_call_operand.vmem [shape: f32[1,128], index: 4, kind: input, shape index: {}]
  %s5 = inlined_call_operand.vmem [shape: f32[2,16,16,128], index: 5, kind: output, shape index: {0}]
  %s6 = inlined_call_operand.vmem [shape: f32[2,8,128], index: 6, kind: output, shape index: {1}]
  %7 = xla_tuple %s5, %s6
  %s8 = sld [smem:[#allocation0]]
  $region65: #{up_forward.6} parent=0
    _
  %s10 = ssub.s32 1, %s8
  %s11 = scalar_select 0, %s10, %s8
  loop: start=0, step=1, limit=34
  $region2: #{up_forward.6} parent=0 // loop_pre_header
    _
  $region3: #{up_forward.6} parent=0 // loop_header
    %s13 = sphi 0, %s17
    %p14 = scmp.ge.s32.totalorder %s13, 34
    %s20 = sphi 0, %s32
    %s21 = sphi 0, %s28
    %s22 = sphi 0, %s20
    %s23 = sphi 0, %s21
    %s24 = sphi 0, %s22
    %s25 = sphi 0, %s23
    %s37 = sphi 0, %s39
    %s40 = sphi 0, %s37
    %s41 = sphi 0, %s40
    %s57 = sphi 0, %s41
    %s67 = sphi 0, %s69
    %s70 = sphi 0, %s67
    %s71 = sphi 0, %s70
    %s87 = sphi 0, %s71
    %s97 = sphi 0, %s99
    %s100 = sphi 0, %s97
    %s101 = sphi 0, %s100
    %s117 = sphi 0, %s101
    %s121 = sphi 0, %s121
    %s123 = sphi 0, %s121
    %s124 = sphi 0, %s123
    %s138 = sphi 0, %s124
    %s142 = sphi 0, %s142
    %s144 = sphi 0, %s142
    %s145 = sphi 0, %s144
    %s159 = sphi 0, %s145
    %s167 = sphi 0, %s169
    %s170 = sphi 0, %s167
    %s171 = sphi 0, %s170
    %s187 = sphi 0, %s171
    %s193 = sphi 0, %s195
    %s196 = sphi 0, %s193
    %s197 = sphi 0, %s196
    %s213 = sphi 0, %s197
  $region4: #{up_forward.6} parent=0 // loop_header_branch
    %16 = sbr.rel (%p14) target = $region8
  $region5: #{up_forward.6} parent=0 // loop_body
    %s18 = ssub.s32 %s13, 1
    %s19 = ssub.s32 %s13, 2
    %s26 = sadd.s32 1, %s21
    %p27 = scmp.ge.s32.totalorder %s26, 16
    %s28 = scalar_select %p27, 0, %s26
    %s29 = sadd.s32 1, %s20
    %s30 = scalar_select %p27, %s29, %s20
    %p31 = scmp.ge.s32.totalorder %s30, 2
    %s32 = scalar_select %p31, 0, %s30
    %s33 = ssub.s32 %s20, %s32
    %s34 = ssub.s32 %s21, %s28
    %s35 = sor.u32 %s33, %s34
    %p36 = scmp.eq.s32.totalorder %s35, 0
    %s38 = sadd.s32 %s37, 1
    %s39 = scalar_select %p36, %s37, %s38
    %p42 = pneg %p36
    %p43 = scmp.eq.s32.totalorder %s13, 31
    %p44 = por %p42, %p43
    %p45 = scmp.ne.s32.totalorder %s37, %s40
    %p46 = scmp.eq.s32.totalorder %s13, 0
    %p47 = por %p45, %p46
    %p48 = scmp.ne.s32.totalorder %s37, %s40
    %p49 = scmp.eq.s32.totalorder %s18, 31
    %p50 = por %p48, %p49
    %p51 = scmp.ne.s32.totalorder %s40, %s41
    %p52 = scmp.eq.s32.totalorder %s18, 0
    %p53 = por %p51, %p52
    %p54 = scmp.ne.s32.totalorder %s40, %s41
    %p55 = scmp.eq.s32.totalorder %s19, 31
    %p56 = por %p54, %p55
    %p58 = scmp.ne.s32.totalorder %s41, %s57
    %p59 = scmp.eq.s32.totalorder %s19, 0
    %p60 = por %p58, %p59
    %s61 = sadd.s32 %s21, 1
    %s62 = sadd.s32 %s28, 1
    %s63 = ssub.s32 %s20, %s32
    %s64 = ssub.s32 %s61, %s62
    %s65 = sor.u32 %s63, %s64
    %p66 = scmp.eq.s32.totalorder %s65, 0
    %s68 = sadd.s32 %s67, 1
    %s69 = scalar_select %p66, %s67, %s68
    %p72 = pneg %p66
    %p73 = scmp.eq.s32.totalorder %s13, 31
    %p74 = por %p72, %p73
    %p75 = scmp.ne.s32.totalorder %s67, %s70
    %p76 = scmp.eq.s32.totalorder %s13, 0
    %p77 = por %p75, %p76
    %p78 = scmp.ne.s32.totalorder %s67, %s70
    %p79 = scmp.eq.s32.totalorder %s18, 31
    %p80 = por %p78, %p79
    %p81 = scmp.ne.s32.totalorder %s70, %s71
    %p82 = scmp.eq.s32.totalorder %s18, 0
    %p83 = por %p81, %p82
    %p84 = scmp.ne.s32.totalorder %s70, %s71
    %p85 = scmp.eq.s32.totalorder %s19, 31
    %p86 = por %p84, %p85
    %p88 = scmp.ne.s32.totalorder %s71, %s87
    %p89 = scmp.eq.s32.totalorder %s19, 0
    %p90 = por %p88, %p89
    %s91 = sadd.s32 %s21, 2
    %s92 = sadd.s32 %s28, 2
    %s93 = ssub.s32 %s20, %s32
    %s94 = ssub.s32 %s91, %s92
    %s95 = sor.u32 %s93, %s94
    %p96 = scmp.eq.s32.totalorder %s95, 0
    %s98 = sadd.s32 %s97, 1
    %s99 = scalar_select %p96, %s97, %s98
    %p102 = pneg %p96
    %p103 = scmp.eq.s32.totalorder %s13, 31
    %p104 = por %p102, %p103
    %p105 = scmp.ne.s32.totalorder %s97, %s100
    %p106 = scmp.eq.s32.totalorder %s13, 0
    %p107 = por %p105, %p106
    %p108 = scmp.ne.s32.totalorder %s97, %s100
    %p109 = scmp.eq.s32.totalorder %s18, 31
    %p110 = por %p108, %p109
    %p111 = scmp.ne.s32.totalorder %s100, %s101
    %p112 = scmp.eq.s32.totalorder %s18, 0
    %p113 = por %p111, %p112
    %p114 = scmp.ne.s32.totalorder %s100, %s101
    %p115 = scmp.eq.s32.totalorder %s19, 31
    %p116 = por %p114, %p115
    %p118 = scmp.ne.s32.totalorder %s101, %s117
    %p119 = scmp.eq.s32.totalorder %s19, 0
    %p120 = por %p118, %p119
    %s122 = sadd.s32 %s121, 1
    %p125 = scmp.eq.s32.totalorder %s13, 31
    %p126 = scmp.ne.s32.totalorder %s121, %s123
    %p127 = scmp.eq.s32.totalorder %s13, 0
    %p128 = por %p126, %p127
    %p129 = scmp.ne.s32.totalorder %s121, %s123
    %p130 = scmp.eq.s32.totalorder %s18, 31
    %p131 = por %p129, %p130
    %p132 = scmp.ne.s32.totalorder %s123, %s124
    %p133 = scmp.eq.s32.totalorder %s18, 0
    %p134 = por %p132, %p133
    %p135 = scmp.ne.s32.totalorder %s123, %s124
    %p136 = scmp.eq.s32.totalorder %s19, 31
    %p137 = por %p135, %p136
    %p139 = scmp.ne.s32.totalorder %s124, %s138
    %p140 = scmp.eq.s32.totalorder %s19, 0
    %p141 = por %p139, %p140
    %s143 = sadd.s32 %s142, 1
    %p146 = scmp.eq.s32.totalorder %s13, 31
    %p147 = scmp.ne.s32.totalorder %s142, %s144
    %p148 = scmp.eq.s32.totalorder %s13, 0
    %p149 = por %p147, %p148
    %p150 = scmp.ne.s32.totalorder %s142, %s144
    %p151 = scmp.eq.s32.totalorder %s18, 31
    %p152 = por %p150, %p151
    %p153 = scmp.ne.s32.totalorder %s144, %s145
    %p154 = scmp.eq.s32.totalorder %s18, 0
    %p155 = por %p153, %p154
    %p156 = scmp.ne.s32.totalorder %s144, %s145
    %p157 = scmp.eq.s32.totalorder %s19, 31
    %p158 = por %p156, %p157
    %p160 = scmp.ne.s32.totalorder %s145, %s159
    %p161 = scmp.eq.s32.totalorder %s19, 0
    %p162 = por %p160, %p161
    %s163 = ssub.s32 %s20, %s32
    %s164 = ssub.s32 %s21, %s28
    %s165 = sor.u32 %s163, %s164
    %p166 = scmp.eq.s32.totalorder %s165, 0
    %s168 = sadd.s32 %s167, 1
    %s169 = scalar_select %p166, %s167, %s168
    %p172 = pneg %p166
    %p173 = scmp.eq.s32.totalorder %s13, 31
    %p174 = por %p172, %p173
    %p175 = scmp.ne.s32.totalorder %s167, %s170
    %p176 = scmp.eq.s32.totalorder %s13, 0
    %p177 = por %p175, %p176
    %p178 = scmp.ne.s32.totalorder %s167, %s170
    %p179 = scmp.eq.s32.totalorder %s18, 31
    %p180 = por %p178, %p179
    %p181 = scmp.ne.s32.totalorder %s170, %s171
    %p182 = scmp.eq.s32.totalorder %s18, 0
    %p183 = por %p181, %p182
    %p184 = scmp.ne.s32.totalorder %s170, %s171
    %p185 = scmp.eq.s32.totalorder %s19, 31
    %p186 = por %p184, %p185
    %p188 = scmp.ne.s32.totalorder %s171, %s187
    %p189 = scmp.eq.s32.totalorder %s19, 0
    %p190 = por %p188, %p189
    %s191 = ssub.s32 %s20, %s32
    %p192 = scmp.eq.s32.totalorder %s191, 0
    %s194 = sadd.s32 %s193, 1
    %s195 = scalar_select %p192, %s193, %s194
    %p198 = pneg %p192
    %p199 = scmp.eq.s32.totalorder %s13, 31
    %p200 = por %p198, %p199
    %p201 = scmp.ne.s32.totalorder %s193, %s196
    %p202 = scmp.eq.s32.totalorder %s13, 0
    %p203 = por %p201, %p202
    %p204 = scmp.ne.s32.totalorder %s193, %s196
    %p205 = scmp.eq.s32.totalorder %s18, 31
    %p206 = por %p204, %p205
    %p207 = scmp.ne.s32.totalorder %s196, %s197
    %p208 = scmp.eq.s32.totalorder %s18, 0
    %p209 = por %p207, %p208
    %p210 = scmp.ne.s32.totalorder %s196, %s197
    %p211 = scmp.eq.s32.totalorder %s19, 31
    %p212 = por %p210, %p211
    %p214 = scmp.ne.s32.totalorder %s197, %s213
    %p215 = scmp.eq.s32.totalorder %s19, 0
    %p216 = por %p214, %p215
    %p217 = scmp.le.s32.totalorder 1, %s13
    %p218 = scmp.lt.s32.totalorder %s13, 33
    %p219 = pnand %p217, %p218
    %p220 = pneg %p219
    // Predicated region
    $region9: #{up_forward.6} parent=5 // pred_check
      _
    $region10: #{up_forward.6} parent=5 // pred_check_branch
      %222 = sbr.rel (%p219) target = $region12
    $region11: #{up_forward.6} parent=5 // pred_region
      %s223 = ssub.s32 %s13, 1
      // Predicated region
      $region13: #{up_forward.6} parent=11 // pred_check
        %p224 = pneg %p134
      $region14: #{up_forward.6} parent=11 // pred_check_branch
        %226 = sbr.rel (%p224) target = $region16
      $region15: #{up_forward.6} parent=11 // pred_region
        _
      $region16: #{up_forward.6} parent=11 // pred_fallthru
        _
      // Predicated region
      $region17: #{up_forward.6} parent=11 // pred_check
        %p227 = pneg %p155
      $region18: #{up_forward.6} parent=11 // pred_check_branch
        %229 = sbr.rel (%p227) target = $region20
      $region19: #{up_forward.6} parent=11 // pred_region
        _
      $region20: #{up_forward.6} parent=11 // pred_fallthru
        _
    $region12: #{up_forward.6} parent=5 // pred_fallthru
      _
    %p230 = scmp.lt.s32.totalorder %s13, 32
    // Predicated region
    $region21: #{up_forward.6} parent=5 // pred_check
      %p231 = pneg %p230
    $region22: #{up_forward.6} parent=5 // pred_check_branch
      %233 = sbr.rel (%p231) target = $region24
    $region23: #{up_forward.6} parent=5 // pred_region
      // Predicated region
      $region25: #{up_forward.6} parent=23 // pred_check
        %p234 = pneg %p47
      $region26: #{up_forward.6} parent=23 // pred_check_branch
        %236 = sbr.rel (%p234) target = $region28
      $region27: #{up_forward.6} parent=23 // pred_region
        %p237 = scmp.lt.s32.totalorder %s20, 1
        %s238 = scalar_select %p237, %s20, 1
        %p239 = scmp.lt.s32.totalorder %s21, 17
        %s240 = scalar_select %p239, %s21, 17
        %s241 = smul.addr %s240, 2
        %s242 = smul.addr %s238, 36
        %s243 = sadd.s32 %s241, %s242
        %s244 = smul.addr %s243, 8
        %s245 = scalar_lea.vmem %s0, %s244
      $region28: #{up_forward.6} parent=23 // pred_fallthru
        _
      // Predicated region
      $region29: #{up_forward.6} parent=23 // pred_check
        %p246 = pneg %p77
      $region30: #{up_forward.6} parent=23 // pred_check_branch
        %248 = sbr.rel (%p246) target = $region32
      $region31: #{up_forward.6} parent=23 // pred_region
        %s249 = sadd.s32 %s21, 1
        %p250 = scmp.lt.s32.totalorder %s20, 1
        %s251 = scalar_select %p250, %s20, 1
        %p252 = scmp.lt.s32.totalorder %s249, 17
        %s253 = scalar_select %p252, %s249, 17
        %s254 = smul.addr %s253, 2
        %s255 = smul.addr %s251, 36
        %s256 = sadd.s32 %s254, %s255
        %s257 = smul.addr %s256, 8
        %s258 = scalar_lea.vmem %s1, %s257
        %s259 = sadd.s32 %s21, 1
      $region32: #{up_forward.6} parent=23 // pred_fallthru
        _
      // Predicated region
      $region33: #{up_forward.6} parent=23 // pred_check
        %p260 = pneg %p107
      $region34: #{up_forward.6} parent=23 // pred_check_branch
        %262 = sbr.rel (%p260) target = $region36
      $region35: #{up_forward.6} parent=23 // pred_region
        %s263 = sadd.s32 %s21, 2
        %p264 = scmp.lt.s32.totalorder %s20, 1
        %s265 = scalar_select %p264, %s20, 1
        %p266 = scmp.lt.s32.totalorder %s263, 17
        %s267 = scalar_select %p266, %s263, 17
        %s268 = smul.addr %s267, 2
        %s269 = smul.addr %s265, 36
        %s270 = sadd.s32 %s268, %s269
        %s271 = smul.addr %s270, 8
        %s272 = scalar_lea.vmem %s2, %s271
        %s273 = sadd.s32 %s21, 2
      $region36: #{up_forward.6} parent=23 // pred_fallthru
        _
    $region24: #{up_forward.6} parent=5 // pred_fallthru
      _
    %p274 = scmp.le.s32.totalorder 1, %s13
    %p275 = scmp.lt.s32.totalorder %s13, 33
    %p276 = pnand %p274, %p275
    %p277 = pneg %p276
    // Predicated region
    $region37: #{up_forward.6} parent=5 // pred_check
      _
    $region38: #{up_forward.6} parent=5 // pred_check_branch
      %279 = sbr.rel (%p276) target = $region40
    $region39: #{up_forward.6} parent=5 // pred_region
      %s280 = ssub.s32 %s13, 1
      %p281 = scmp.lt.s32.totalorder %s22, 1
      %s282 = scalar_select %p281, %s22, 1
      %p283 = scmp.lt.s32.totalorder %s23, 17
      %s284 = scalar_select %p283, %s23, 17
      %s285 = smul.addr %s284, 2
      %s286 = smul.addr %s282, 36
      %s287 = sadd.s32 %s285, %s286
      %s288 = smul.addr %s287, 8
      %s289 = scalar_lea.vmem %s0, %s288
      %p290 = pneg %p53
      %p291 = pneg %p50
      %s292 = sadd.s32 %s23, 1
      %p293 = scmp.lt.s32.totalorder %s22, 1
      %s294 = scalar_select %p293, %s22, 1
      %p295 = scmp.lt.s32.totalorder %s292, 17
      %s296 = scalar_select %p295, %s292, 17
      %s297 = smul.addr %s296, 2
      %s298 = smul.addr %s294, 36
      %s299 = sadd.s32 %s297, %s298
      %s300 = smul.addr %s299, 8
      %s301 = scalar_lea.vmem %s1, %s300
      %p302 = pneg %p83
      %p303 = pneg %p80
      %s304 = sadd.s32 %s23, 2
      %p305 = scmp.lt.s32.totalorder %s22, 1
      %s306 = scalar_select %p305, %s22, 1
      %p307 = scmp.lt.s32.totalorder %s304, 17
      %s308 = scalar_select %p307, %s304, 17
      %s309 = smul.addr %s308, 2
      %s310 = smul.addr %s306, 36
      %s311 = sadd.s32 %s309, %s310
      %s312 = smul.addr %s311, 8
      %s313 = scalar_lea.vmem %s2, %s312
      %p314 = pneg %p113
      %p315 = pneg %p110
      %p316 = pneg %p134
      %p317 = pneg %p131
      %p318 = pneg %p155
      %p319 = pneg %p152
      %p320 = pneg %p183
      %p321 = pneg %p180
      %p322 = scmp.lt.s32.totalorder %s22, 1
      %s323 = scalar_select %p322, %s22, 1
      %p324 = scmp.lt.s32.totalorder %s23, 15
      %s325 = scalar_select %p324, %s23, 15
      %s326 = smul.addr %s325, 2
      %s327 = smul.addr %s323, 32
      %s328 = sadd.s32 %s326, %s327
      %s329 = smul.addr %s328, 8
      %s330 = scalar_lea.vmem %s5, %s329
      %p331 = pneg %p209
      %p332 = pneg %p206
      %p333 = scmp.lt.s32.totalorder %s22, 1
      %s334 = scalar_select %p333, %s22, 1
      %s335 = smul.addr %s334, 8
      %s336 = scalar_lea.vmem %s6, %s335
      %p337 = scmp.lt.s32.totalorder %s22, 1
      %s338 = scalar_select %p337, %s22, 1
      %p339 = scmp.lt.s32.totalorder %s23, 17
      %s340 = scalar_select %p339, %s23, 17
      %s341 = smul.addr %s340, 2
      %s342 = smul.addr %s338, 36
      %s343 = sadd.s32 %s341, %s342
      %s344 = smul.addr %s343, 8
      %s345 = scalar_lea.vmem %s0, %s344
      %s346 = sadd.s32 %s23, 1
      %p347 = scmp.lt.s32.totalorder %s22, 1
      %s348 = scalar_select %p347, %s22, 1
      %p349 = scmp.lt.s32.totalorder %s346, 17
      %s350 = scalar_select %p349, %s346, 17
      %s351 = smul.addr %s350, 2
      %s352 = smul.addr %s348, 36
      %s353 = sadd.s32 %s351, %s352
      %s354 = smul.addr %s353, 8
      %s355 = scalar_lea.vmem %s1, %s354
      %s356 = sadd.s32 %s23, 1
      %s357 = sadd.s32 %s23, 2
      %p358 = scmp.lt.s32.totalorder %s22, 1
      %s359 = scalar_select %p358, %s22, 1
      %p360 = scmp.lt.s32.totalorder %s357, 17
      %s361 = scalar_select %p360, %s357, 17
      %s362 = smul.addr %s361, 2
      %s363 = smul.addr %s359, 36
      %s364 = sadd.s32 %s362, %s363
      %s365 = smul.addr %s364, 8
      %s366 = scalar_lea.vmem %s2, %s365
      %s367 = sadd.s32 %s23, 2
      %p368 = scmp.lt.s32.totalorder %s22, 1
      %s369 = scalar_select %p368, %s22, 1
      %p370 = scmp.lt.s32.totalorder %s23, 15
      %s371 = scalar_select %p370, %s23, 15
      %s372 = smul.addr %s371, 2
      %s373 = smul.addr %s369, 32
      %s374 = sadd.s32 %s372, %s373
      %s375 = smul.addr %s374, 8
      %s376 = scalar_lea.vmem %s5, %s375
      %p377 = scmp.lt.s32.totalorder %s22, 1
      %s378 = scalar_select %p377, %s22, 1
      %s379 = smul.addr %s378, 8
      %s380 = scalar_lea.vmem %s6, %s379
      %v381 = vld [vmem:[%s345] sm:$0xff]
      %v382 = vld [vmem:[%s345 + $0x8] sm:$0xff]
      %v383 = vld [vmem:[%s3] sm:$0xff]
      %v384 = vld [vmem:[%s3 + $0x8] sm:$0xff]
      %v385 = vld [vmem:[%s3 + $0x10] sm:$0xff]
      %v386 = vld [vmem:[%s355] sm:$0xff]
      %v387 = vld [vmem:[%s355 + $0x8] sm:$0xff]
      %s388 = scalar_lea.vmem %s3, 24
      %v389 = vld [vmem:[%s388] sm:$0xff]
      %v390 = vld [vmem:[%s388 + $0x8] sm:$0xff]
      %v391 = vld [vmem:[%s388 + $0x10] sm:$0xff]
      %vm392 = vcmask 195584
      %v394 = vsel %vm392, %v386, 0
      %v397 = vsel %vm392, %v387, 0
      %399 = vmatprep.subr.mxu0 0.0
      %400 = vmatpush1.msra.mxu0 0.0
      %401 = vmatprep.subr.mxu0 0.0
      %402 = vmatpush1.msra.mxu0 0.0
      %403 = vmatprep.subr.mxu0 0.0
      %404 = vmatpush1.msra.mxu0 0.0
      %405 = vmatprep.subr.mxu0 0.0
      %406 = vmatpush1.msra.mxu0 0.0
      %407 = vmatprep.subr.mxu0 0.0
      %408 = vmatpush1.msra.mxu0 0.0
      %409 = vmatprep.subr.mxu0 0.0
      %410 = vmatpush1.msra.mxu0 0.0
      %411 = vmatprep.subr.mxu0 0.0
      %412 = vmatpush1.msra.mxu0 0.0
      %413 = vmatprep.subr.mxu0 0.0
      %414 = vmatpush1.msra.mxu0 0.0
      %415 = vmatprep.subr.mxu0 0.0
      %416 = vmatpush1.msra.mxu0 0.0
      %417 = vmatprep.subr.mxu0 0.0
      %418 = vmatpush1.msra.mxu0 0.0
      %419 = vmatprep.subr.mxu0 0.0
      %420 = vmatpush1.msra.mxu0 0.0
      %421 = vmatprep.subr.mxu0 0.0
      %422 = vmatpush1.msra.mxu0 0.0
      %423 = vmatprep.subr.mxu0 0.0
      %424 = vmatpush1.msra.mxu0 0.0
      %425 = vmatprep.subr.mxu0 0.0
      %426 = vmatpush1.msra.mxu0 %v391
      %427 = vmatprep.subr.mxu0 0.0
      %428 = vmatpush1.msra.mxu0 %v390
      %429 = vmatprep.subr.mxu0 0.0
      %430 = vmatpush1.msra.mxu0 %v389
      %431 = vmatprep.subr.mxu0 0.0
      %432 = vmatpush2.msra.mxu0 0.0
      %433 = vmatprep.subr.mxu0 0.0
      %434 = vmatpush2.msra.mxu0 0.0
      %435 = vmatprep.subr.mxu0 0.0
      %436 = vmatpush2.msra.mxu0 0.0
      %437 = vmatprep.subr.mxu0 0.0
      %438 = vmatpush2.msra.mxu0 0.0
      %439 = vmatprep.subr.mxu0 0.0
      %440 = vmatpush2.msra.mxu0 0.0
      %441 = vmatprep.subr.mxu0 0.0
      %442 = vmatpush2.msra.mxu0 0.0
      %443 = vmatprep.subr.mxu0 0.0
      %444 = vmatpush2.msra.mxu0 0.0
      %445 = vmatprep.subr.mxu0 0.0
      %446 = vmatpush2.msra.mxu0 0.0
      %447 = vmatprep.subr.mxu0 0.0
      %448 = vmatpush2.msra.mxu0 0.0
      %449 = vmatprep.subr.mxu0 0.0
      %450 = vmatpush2.msra.mxu0 0.0
      %451 = vmatprep.subr.mxu0 0.0
      %452 = vmatpush2.msra.mxu0 0.0
      %453 = vmatprep.subr.mxu0 0.0
      %454 = vmatpush2.msra.mxu0 0.0
      %455 = vmatprep.subr.mxu0 0.0
      %456 = vmatpush2.msra.mxu0 0.0
      %457 = vmatprep.subr.mxu0 0.0
      %458 = vmatpush2.msra.mxu0 0.0
      %459 = vmatprep.subr.mxu0 0.0
      %460 = vmatpush2.msra.mxu0 0.0
      %461 = vmatprep.subr.mxu0 0.0
      %462 = vmatpush2.msra.mxu0 0.0
      %463 = vmatprep.mubr.f32.mxu0 0.0
      %464 = vmatmul.mubr.f32.gmra.mxu0 %v394
      %v465 = vpop.f32.mrf.mxu0
      %v466 = vadd.f32 0.0, %v465
      %v467 = vpop.f32.mrf.mxu0
      %468 = vmatprep.mubr.f32.mxu0 0.0
      %469 = vmatmul.mubr.f32.gmra.mxu0 %v397
      %v470 = vpop.f32.mrf.mxu0
      %v471 = vadd.f32 0.0, %v470
      %v472 = vpop.f32.mrf.mxu0
      %473 = vdwg.mxu0
      %v475 = vsel %vm392, %v381, 0
      %v478 = vsel %vm392, %v382, 0
      %480 = vmatprep.subr.mxu0 0.0
      %481 = vmatpush1.msra.mxu0 0.0
      %482 = vmatprep.subr.mxu0 0.0
      %483 = vmatpush1.msra.mxu0 0.0
      %484 = vmatprep.subr.mxu0 0.0
      %485 = vmatpush1.msra.mxu0 0.0
      %486 = vmatprep.subr.mxu0 0.0
      %487 = vmatpush1.msra.mxu0 0.0
      %488 = vmatprep.subr.mxu0 0.0
      %489 = vmatpush1.msra.mxu0 0.0
      %490 = vmatprep.subr.mxu0 0.0
      %491 = vmatpush1.msra.mxu0 0.0
      %492 = vmatprep.subr.mxu0 0.0
      %493 = vmatpush1.msra.mxu0 0.0
      %494 = vmatprep.subr.mxu0 0.0
      %495 = vmatpush1.msra.mxu0 0.0
      %496 = vmatprep.subr.mxu0 0.0
      %497 = vmatpush1.msra.mxu0 0.0
      %498 = vmatprep.subr.mxu0 0.0
      %499 = vmatpush1.msra.mxu0 0.0
      %500 = vmatprep.subr.mxu0 0.0
      %501 = vmatpush1.msra.mxu0 0.0
      %502 = vmatprep.subr.mxu0 0.0
      %503 = vmatpush1.msra.mxu0 0.0
      %504 = vmatprep.subr.mxu0 0.0
      %505 = vmatpush1.msra.mxu0 0.0
      %506 = vmatprep.subr.mxu0 0.0
      %507 = vmatpush1.msra.mxu0 %v385
      %508 = vmatprep.subr.mxu0 0.0
      %509 = vmatpush1.msra.mxu0 %v384
      %510 = vmatprep.subr.mxu0 0.0
      %511 = vmatpush1.msra.mxu0 %v383
      %512 = vmatprep.subr.mxu0 0.0
      %513 = vmatpush2.msra.mxu0 0.0
      %514 = vmatprep.subr.mxu0 0.0
      %515 = vmatpush2.msra.mxu0 0.0
      %516 = vmatprep.subr.mxu0 0.0
      %517 = vmatpush2.msra.mxu0 0.0
      %518 = vmatprep.subr.mxu0 0.0
      %519 = vmatpush2.msra.mxu0 0.0
      %520 = vmatprep.subr.mxu0 0.0
      %521 = vmatpush2.msra.mxu0 0.0
      %522 = vmatprep.subr.mxu0 0.0
      %523 = vmatpush2.msra.mxu0 0.0
      %524 = vmatprep.subr.mxu0 0.0
      %525 = vmatpush2.msra.mxu0 0.0
      %526 = vmatprep.subr.mxu0 0.0
      %527 = vmatpush2.msra.mxu0 0.0
      %528 = vmatprep.subr.mxu0 0.0
      %529 = vmatpush2.msra.mxu0 0.0
      %530 = vmatprep.subr.mxu0 0.0
      %531 = vmatpush2.msra.mxu0 0.0
      %532 = vmatprep.subr.mxu0 0.0
      %533 = vmatpush2.msra.mxu0 0.0
      %534 = vmatprep.subr.mxu0 0.0
      %535 = vmatpush2.msra.mxu0 0.0
      %536 = vmatprep.subr.mxu0 0.0
      %537 = vmatpush2.msra.mxu0 0.0
      %538 = vmatprep.subr.mxu0 0.0
      %539 = vmatpush2.msra.mxu0 0.0
      %540 = vmatprep.subr.mxu0 0.0
      %541 = vmatpush2.msra.mxu0 0.0
      %542 = vmatprep.subr.mxu0 0.0
      %543 = vmatpush2.msra.mxu0 0.0
      %544 = vmatprep.mubr.f32.mxu0 0.0
      %545 = vmatmul.mubr.f32.gmra.mxu0 %v475
      %v546 = vpop.f32.mrf.mxu0
      %v547 = vadd.f32 %v466, %v546
      %v548 = vpop.f32.mrf.mxu0
      %549 = vmatprep.mubr.f32.mxu0 0.0
      %550 = vmatmul.mubr.f32.gmra.mxu0 %v478
      %v551 = vpop.f32.mrf.mxu0
      %v552 = vadd.f32 %v471, %v551
      %v553 = vpop.f32.mrf.mxu0
      %554 = vdwg.mxu0
      %v555 = vld [vmem:[%s366] sm:$0xff]
      %v556 = vld [vmem:[%s366 + $0x8] sm:$0xff]
      %s557 = scalar_lea.vmem %s3, 48
      %v558 = vld [vmem:[%s557] sm:$0xff]
      %v559 = vld [vmem:[%s557 + $0x8] sm:$0xff]
      %v560 = vld [vmem:[%s557 + $0x10] sm:$0xff]
      %v562 = vsel %vm392, %v555, 0
      %v565 = vsel %vm392, %v556, 0
      %567 = vmatprep.subr.mxu0 0.0
      %568 = vmatpush1.msra.mxu0 0.0
      %569 = vmatprep.subr.mxu0 0.0
      %570 = vmatpush1.msra.mxu0 0.0
      %571 = vmatprep.subr.mxu0 0.0
      %572 = vmatpush1.msra.mxu0 0.0
      %573 = vmatprep.subr.mxu0 0.0
      %574 = vmatpush1.msra.mxu0 0.0
      %575 = vmatprep.subr.mxu0 0.0
      %576 = vmatpush1.msra.mxu0 0.0
      %577 = vmatprep.subr.mxu0 0.0
      %578 = vmatpush1.msra.mxu0 0.0
      %579 = vmatprep.subr.mxu0 0.0
      %580 = vmatpush1.msra.mxu0 0.0
      %581 = vmatprep.subr.mxu0 0.0
      %582 = vmatpush1.msra.mxu0 0.0
      %583 = vmatprep.subr.mxu0 0.0
      %584 = vmatpush1.msra.mxu0 0.0
      %585 = vmatprep.subr.mxu0 0.0
      %586 = vmatpush1.msra.mxu0 0.0
      %587 = vmatprep.subr.mxu0 0.0
      %588 = vmatpush1.msra.mxu0 0.0
      %589 = vmatprep.subr.mxu0 0.0
      %590 = vmatpush1.msra.mxu0 0.0
      %591 = vmatprep.subr.mxu0 0.0
      %592 = vmatpush1.msra.mxu0 0.0
      %593 = vmatprep.subr.mxu0 0.0
      %594 = vmatpush1.msra.mxu0 %v560
      %595 = vmatprep.subr.mxu0 0.0
      %596 = vmatpush1.msra.mxu0 %v559
      %597 = vmatprep.subr.mxu0 0.0
      %598 = vmatpush1.msra.mxu0 %v558
      %599 = vmatprep.subr.mxu0 0.0
      %600 = vmatpush2.msra.mxu0 0.0
      %601 = vmatprep.subr.mxu0 0.0
      %602 = vmatpush2.msra.mxu0 0.0
      %603 = vmatprep.subr.mxu0 0.0
      %604 = vmatpush2.msra.mxu0 0.0
      %605 = vmatprep.subr.mxu0 0.0
      %606 = vmatpush2.msra.mxu0 0.0
      %607 = vmatprep.subr.mxu0 0.0
      %608 = vmatpush2.msra.mxu0 0.0
      %609 = vmatprep.subr.mxu0 0.0
      %610 = vmatpush2.msra.mxu0 0.0
      %611 = vmatprep.subr.mxu0 0.0
      %612 = vmatpush2.msra.mxu0 0.0
      %613 = vmatprep.subr.mxu0 0.0
      %614 = vmatpush2.msra.mxu0 0.0
      %615 = vmatprep.subr.mxu0 0.0
      %616 = vmatpush2.msra.mxu0 0.0
      %617 = vmatprep.subr.mxu0 0.0
      %618 = vmatpush2.msra.mxu0 0.0
      %619 = vmatprep.subr.mxu0 0.0
      %620 = vmatpush2.msra.mxu0 0.0
      %621 = vmatprep.subr.mxu0 0.0
      %622 = vmatpush2.msra.mxu0 0.0
      %623 = vmatprep.subr.mxu0 0.0
      %624 = vmatpush2.msra.mxu0 0.0
      %625 = vmatprep.subr.mxu0 0.0
      %626 = vmatpush2.msra.mxu0 0.0
      %627 = vmatprep.subr.mxu0 0.0
      %628 = vmatpush2.msra.mxu0 0.0
      %629 = vmatprep.subr.mxu0 0.0
      %630 = vmatpush2.msra.mxu0 0.0
      %631 = vmatprep.mubr.f32.mxu0 0.0
      %632 = vmatmul.mubr.f32.gmra.mxu0 %v562
      %v633 = vpop.f32.mrf.mxu0
      %v634 = vadd.f32 0.0, %v633
      %v635 = vpop.f32.mrf.mxu0
      %636 = vmatprep.mubr.f32.mxu0 0.0
      %637 = vmatmul.mubr.f32.gmra.mxu0 %v565
      %v638 = vpop.f32.mrf.mxu0
      %v639 = vadd.f32 0.0, %v638
      %v640 = vpop.f32.mrf.mxu0
      %641 = vdwg.mxu0
      %v642 = vadd.f32 %v547, %v634
      %v643 = vadd.f32 %v552, %v639
      %v644 = vld [vmem:[%s4] sm:$0x1]
      %v646 = vlaneseq
      %v647 = vshrl.u32 %v646, 7
      %v648 = vsub.s32 0, %v647
      %v649 = vrot.slane %v644, %v648
      %v651 = vadd.f32 %v642, %v649
      %v652 = vadd.f32 %v643, %v649
      %653 = vst [vmem:[%s376] sm:$0xff] %v651
      %654 = vst [vmem:[%s376 + $0x8] sm:$0xff] %v652
      %p655 = scmp.eq.s32.totalorder %s23, 0
      // Predicated region
      $region41: #{up_forward.6} parent=39 // pred_check
        %p656 = pneg %p655
      $region42: #{up_forward.6} parent=39 // pred_check_branch
        %658 = sbr.rel (%p656) target = $region44
      $region43: #{up_forward.6} parent=39 // pred_region
        %659 = vst [vmem:[%s380] sm:$0xff] 0.0
      $region44: #{up_forward.6} parent=39 // pred_fallthru
        _
      %v660 = vld [vmem:[%s380] sm:$0x1]
      %v661 = vadd.f32 %v651, %v652
      %v662 = vrot.slane %v661, 4
      %v663 = vadd.f32 %v661, %v662
      %v664 = vrot.slane %v663, 2
      %v665 = vadd.f32 %v663, %v664
      %v666 = vrot.slane %v665, 1
      %v667 = vadd.f32 %v665, %v666
      %v668 = vadd.f32 %v660, %v667
      %669 = vst [vmem:[%s380] sm:$0x1] %v668
      %v670 = vld [vmem:[%s380 + $0x1] sm:$0x1]
      %v671 = vmul.f32 %v651, %v651
      %v672 = vmul.f32 %v652, %v652
      %v673 = vadd.f32 %v671, %v672
      %v674 = vrot.slane %v673, 4
      %v675 = vadd.f32 %v673, %v674
      %v676 = vrot.slane %v675, 2
      %v677 = vadd.f32 %v675, %v676
      %v678 = vrot.slane %v677, 1
      %v679 = vadd.f32 %v677, %v678
      %v680 = vadd.f32 %v670, %v679
      %681 = vst [vmem:[%s380 + $0x1] sm:$0x1] %v680
      %p682 = scmp.lt.s32.totalorder %s22, 1
      %s683 = scalar_select %p682, %s22, 1
      %p684 = scmp.lt.s32.totalorder %s23, 15
      %s685 = scalar_select %p684, %s23, 15
      %s686 = smul.addr %s685, 2
      %s687 = smul.addr %s683, 32
      %s688 = sadd.s32 %s686, %s687
      %s689 = smul.addr %s688, 8
      %s690 = scalar_lea.vmem %s5, %s689
      %p691 = scmp.lt.s32.totalorder %s22, 1
      %s692 = scalar_select %p691, %s22, 1
      %s693 = smul.addr %s692, 8
      %s694 = scalar_lea.vmem %s6, %s693
      // Predicated region
      $region45: #{up_forward.6} parent=39 // pred_check
        %p695 = pneg %p180
      $region46: #{up_forward.6} parent=39 // pred_check_branch
        %697 = sbr.rel (%p695) target = $region48
      $region47: #{up_forward.6} parent=39 // pred_region
        _
      $region48: #{up_forward.6} parent=39 // pred_fallthru
        _
      // Predicated region
      $region49: #{up_forward.6} parent=39 // pred_check
        %p698 = pneg %p206
      $region50: #{up_forward.6} parent=39 // pred_check_branch
        %700 = sbr.rel (%p698) target = $region52
      $region51: #{up_forward.6} parent=39 // pred_region
        _
      $region52: #{up_forward.6} parent=39 // pred_fallthru
        _
    $region40: #{up_forward.6} parent=5 // pred_fallthru
      _
    %p701 = scmp.le.s32.totalorder 2, %s13
    // Predicated region
    $region53: #{up_forward.6} parent=5 // pred_check
      %p702 = pneg %p701
    $region54: #{up_forward.6} parent=5 // pred_check_branch
      %704 = sbr.rel (%p702) target = $region56
    $region55: #{up_forward.6} parent=5 // pred_region
      %s705 = ssub.s32 %s13, 2
      // Predicated region
      $region57: #{up_forward.6} parent=55 // pred_check
        %p706 = pneg %p186
      $region58: #{up_forward.6} parent=55 // pred_check_branch
        %708 = sbr.rel (%p706) target = $region60
      $region59: #{up_forward.6} parent=55 // pred_region
        %p709 = scmp.lt.s32.totalorder %s24, 1
        %s710 = scalar_select %p709, %s24, 1
        %p711 = scmp.lt.s32.totalorder %s25, 15
        %s712 = scalar_select %p711, %s25, 15
        %s713 = smul.addr %s712, 2
        %s714 = smul.addr %s710, 32
        %s715 = sadd.s32 %s713, %s714
        %s716 = smul.addr %s715, 8
        %s717 = scalar_lea.vmem %s5, %s716
      $region60: #{up_forward.6} parent=55 // pred_fallthru
        _
      // Predicated region
      $region61: #{up_forward.6} parent=55 // pred_check
        %p718 = pneg %p212
      $region62: #{up_forward.6} parent=55 // pred_check_branch
        %720 = sbr.rel (%p718) target = $region64
      $region63: #{up_forward.6} parent=55 // pred_region
        %p721 = scmp.lt.s32.totalorder %s24, 1
        %s722 = scalar_select %p721, %s24, 1
        %s723 = smul.addr %s722, 8
        %s724 = scalar_lea.vmem %s6, %s723
      $region64: #{up_forward.6} parent=55 // pred_fallthru
        _
    $region56: #{up_forward.6} parent=5 // pred_fallthru
      _
  $region6: #{up_forward.6} parent=0 // loop_footer
    %s17 = sadd.s32 1, %s13
  $region7: #{up_forward.6} parent=0 // loop_footer_branch
    %12 = sbr.rel target = $region3
  $region8: #{up_forward.6} parent=0 // loop_exit
    _

// kernel: up_forward.8
$region0: #{up_forward.8}
  #allocation0 [shape = 'u32[]', space=smem, size = 0x4, offset = 0x4, fixed_abs, tag = 'smem constant byte address 0x4 - core index']
  #allocation1 [shape = 'u32[144,128]{1,0:T(1,128)}', space=vmem, size = 0x12000, scoped, tag = 'internal scratch']
  %s0 = inlined_call_operand.vmem [shape: f32[2,18,16,12], index: 0, kind: input, shape index: {}, may-alias: {0,1,2}]
  %s1 = inlined_call_operand.vmem [shape: f32[2,18,16,12], index: 1, kind: input, shape index: {}, may-alias: {0,1,2}]
  %s2 = inlined_call_operand.vmem [shape: f32[2,18,16,12], index: 2, kind: input, shape index: {}, may-alias: {0,1,2}]
  %s3 = inlined_call_operand.vmem [shape: f32[3,12,128], index: 3, kind: input, shape index: {}]
  %s4 = inlined_call_operand.vmem [shape: f32[1,128], index: 4, kind: input, shape index: {}]
  %s5 = inlined_call_operand.vmem [shape: f32[2,16,16,128], index: 5, kind: output, shape index: {0}]
  %s6 = inlined_call_operand.vmem [shape: f32[2,8,128], index: 6, kind: output, shape index: {1}]
  %7 = xla_tuple %s5, %s6
  %s8 = sld [smem:[#allocation0]]
  $region65: #{up_forward.8} parent=0
    _
  %s10 = ssub.s32 1, %s8
  %s11 = scalar_select 0, %s10, %s8
  loop: start=0, step=1, limit=34
  $region2: #{up_forward.8} parent=0 // loop_pre_header
    _
  $region3: #{up_forward.8} parent=0 // loop_header
    %s13 = sphi 0, %s17
    %p14 = scmp.ge.s32.totalorder %s13, 34
    %s20 = sphi 0, %s32
    %s21 = sphi 0, %s28
    %s22 = sphi 0, %s20
    %s23 = sphi 0, %s21
    %s24 = sphi 0, %s22
    %s25 = sphi 0, %s23
    %s37 = sphi 0, %s39
    %s40 = sphi 0, %s37
    %s41 = sphi 0, %s40
    %s57 = sphi 0, %s41
    %s67 = sphi 0, %s69
    %s70 = sphi 0, %s67
    %s71 = sphi 0, %s70
    %s87 = sphi 0, %s71
    %s97 = sphi 0, %s99
    %s100 = sphi 0, %s97
    %s101 = sphi 0, %s100
    %s117 = sphi 0, %s101
    %s121 = sphi 0, %s121
    %s123 = sphi 0, %s121
    %s124 = sphi 0, %s123
    %s138 = sphi 0, %s124
    %s142 = sphi 0, %s142
    %s144 = sphi 0, %s142
    %s145 = sphi 0, %s144
    %s159 = sphi 0, %s145
    %s167 = sphi 0, %s169
    %s170 = sphi 0, %s167
    %s171 = sphi 0, %s170
    %s187 = sphi 0, %s171
    %s193 = sphi 0, %s195
    %s196 = sphi 0, %s193
    %s197 = sphi 0, %s196
    %s213 = sphi 0, %s197
  $region4: #{up_forward.8} parent=0 // loop_header_branch
    %16 = sbr.rel (%p14) target = $region8
  $region5: #{up_forward.8} parent=0 // loop_body
    %s18 = ssub.s32 %s13, 1
    %s19 = ssub.s32 %s13, 2
    %s26 = sadd.s32 1, %s21
    %p27 = scmp.ge.s32.totalorder %s26, 16
    %s28 = scalar_select %p27, 0, %s26
    %s29 = sadd.s32 1, %s20
    %s30 = scalar_select %p27, %s29, %s20
    %p31 = scmp.ge.s32.totalorder %s30, 2
    %s32 = scalar_select %p31, 0, %s30
    %s33 = ssub.s32 %s20, %s32
    %s34 = ssub.s32 %s21, %s28
    %s35 = sor.u32 %s33, %s34
    %p36 = scmp.eq.s32.totalorder %s35, 0
    %s38 = sadd.s32 %s37, 1
    %s39 = scalar_select %p36, %s37, %s38
    %p42 = pneg %p36
    %p43 = scmp.eq.s32.totalorder %s13, 31
    %p44 = por %p42, %p43
    %p45 = scmp.ne.s32.totalorder %s37, %s40
    %p46 = scmp.eq.s32.totalorder %s13, 0
    %p47 = por %p45, %p46
    %p48 = scmp.ne.s32.totalorder %s37, %s40
    %p49 = scmp.eq.s32.totalorder %s18, 31
    %p50 = por %p48, %p49
    %p51 = scmp.ne.s32.totalorder %s40, %s41
    %p52 = scmp.eq.s32.totalorder %s18, 0
    %p53 = por %p51, %p52
    %p54 = scmp.ne.s32.totalorder %s40, %s41
    %p55 = scmp.eq.s32.totalorder %s19, 31
    %p56 = por %p54, %p55
    %p58 = scmp.ne.s32.totalorder %s41, %s57
    %p59 = scmp.eq.s32.totalorder %s19, 0
    %p60 = por %p58, %p59
    %s61 = sadd.s32 %s21, 1
    %s62 = sadd.s32 %s28, 1
    %s63 = ssub.s32 %s20, %s32
    %s64 = ssub.s32 %s61, %s62
    %s65 = sor.u32 %s63, %s64
    %p66 = scmp.eq.s32.totalorder %s65, 0
    %s68 = sadd.s32 %s67, 1
    %s69 = scalar_select %p66, %s67, %s68
    %p72 = pneg %p66
    %p73 = scmp.eq.s32.totalorder %s13, 31
    %p74 = por %p72, %p73
    %p75 = scmp.ne.s32.totalorder %s67, %s70
    %p76 = scmp.eq.s32.totalorder %s13, 0
    %p77 = por %p75, %p76
    %p78 = scmp.ne.s32.totalorder %s67, %s70
    %p79 = scmp.eq.s32.totalorder %s18, 31
    %p80 = por %p78, %p79
    %p81 = scmp.ne.s32.totalorder %s70, %s71
    %p82 = scmp.eq.s32.totalorder %s18, 0
    %p83 = por %p81, %p82
    %p84 = scmp.ne.s32.totalorder %s70, %s71
    %p85 = scmp.eq.s32.totalorder %s19, 31
    %p86 = por %p84, %p85
    %p88 = scmp.ne.s32.totalorder %s71, %s87
    %p89 = scmp.eq.s32.totalorder %s19, 0
    %p90 = por %p88, %p89
    %s91 = sadd.s32 %s21, 2
    %s92 = sadd.s32 %s28, 2
    %s93 = ssub.s32 %s20, %s32
    %s94 = ssub.s32 %s91, %s92
    %s95 = sor.u32 %s93, %s94
    %p96 = scmp.eq.s32.totalorder %s95, 0
    %s98 = sadd.s32 %s97, 1
    %s99 = scalar_select %p96, %s97, %s98
    %p102 = pneg %p96
    %p103 = scmp.eq.s32.totalorder %s13, 31
    %p104 = por %p102, %p103
    %p105 = scmp.ne.s32.totalorder %s97, %s100
    %p106 = scmp.eq.s32.totalorder %s13, 0
    %p107 = por %p105, %p106
    %p108 = scmp.ne.s32.totalorder %s97, %s100
    %p109 = scmp.eq.s32.totalorder %s18, 31
    %p110 = por %p108, %p109
    %p111 = scmp.ne.s32.totalorder %s100, %s101
    %p112 = scmp.eq.s32.totalorder %s18, 0
    %p113 = por %p111, %p112
    %p114 = scmp.ne.s32.totalorder %s100, %s101
    %p115 = scmp.eq.s32.totalorder %s19, 31
    %p116 = por %p114, %p115
    %p118 = scmp.ne.s32.totalorder %s101, %s117
    %p119 = scmp.eq.s32.totalorder %s19, 0
    %p120 = por %p118, %p119
    %s122 = sadd.s32 %s121, 1
    %p125 = scmp.eq.s32.totalorder %s13, 31
    %p126 = scmp.ne.s32.totalorder %s121, %s123
    %p127 = scmp.eq.s32.totalorder %s13, 0
    %p128 = por %p126, %p127
    %p129 = scmp.ne.s32.totalorder %s121, %s123
    %p130 = scmp.eq.s32.totalorder %s18, 31
    %p131 = por %p129, %p130
    %p132 = scmp.ne.s32.totalorder %s123, %s124
    %p133 = scmp.eq.s32.totalorder %s18, 0
    %p134 = por %p132, %p133
    %p135 = scmp.ne.s32.totalorder %s123, %s124
    %p136 = scmp.eq.s32.totalorder %s19, 31
    %p137 = por %p135, %p136
    %p139 = scmp.ne.s32.totalorder %s124, %s138
    %p140 = scmp.eq.s32.totalorder %s19, 0
    %p141 = por %p139, %p140
    %s143 = sadd.s32 %s142, 1
    %p146 = scmp.eq.s32.totalorder %s13, 31
    %p147 = scmp.ne.s32.totalorder %s142, %s144
    %p148 = scmp.eq.s32.totalorder %s13, 0
    %p149 = por %p147, %p148
    %p150 = scmp.ne.s32.totalorder %s142, %s144
    %p151 = scmp.eq.s32.totalorder %s18, 31
    %p152 = por %p150, %p151
    %p153 = scmp.ne.s32.totalorder %s144, %s145
    %p154 = scmp.eq.s32.totalorder %s18, 0
    %p155 = por %p153, %p154
    %p156 = scmp.ne.s32.totalorder %s144, %s145
    %p157 = scmp.eq.s32.totalorder %s19, 31
    %p158 = por %p156, %p157
    %p160 = scmp.ne.s32.totalorder %s145, %s159
    %p161 = scmp.eq.s32.totalorder %s19, 0
    %p162 = por %p160, %p161
    %s163 = ssub.s32 %s20, %s32
    %s164 = ssub.s32 %s21, %s28
    %s165 = sor.u32 %s163, %s164
    %p166 = scmp.eq.s32.totalorder %s165, 0
    %s168 = sadd.s32 %s167, 1
    %s169 = scalar_select %p166, %s167, %s168
    %p172 = pneg %p166
    %p173 = scmp.eq.s32.totalorder %s13, 31
    %p174 = por %p172, %p173
    %p175 = scmp.ne.s32.totalorder %s167, %s170
    %p176 = scmp.eq.s32.totalorder %s13, 0
    %p177 = por %p175, %p176
    %p178 = scmp.ne.s32.totalorder %s167, %s170
    %p179 = scmp.eq.s32.totalorder %s18, 31
    %p180 = por %p178, %p179
    %p181 = scmp.ne.s32.totalorder %s170, %s171
    %p182 = scmp.eq.s32.totalorder %s18, 0
    %p183 = por %p181, %p182
    %p184 = scmp.ne.s32.totalorder %s170, %s171
    %p185 = scmp.eq.s32.totalorder %s19, 31
    %p186 = por %p184, %p185
    %p188 = scmp.ne.s32.totalorder %s171, %s187
    %p189 = scmp.eq.s32.totalorder %s19, 0
    %p190 = por %p188, %p189
    %s191 = ssub.s32 %s20, %s32
    %p192 = scmp.eq.s32.totalorder %s191, 0
    %s194 = sadd.s32 %s193, 1
    %s195 = scalar_select %p192, %s193, %s194
    %p198 = pneg %p192
    %p199 = scmp.eq.s32.totalorder %s13, 31
    %p200 = por %p198, %p199
    %p201 = scmp.ne.s32.totalorder %s193, %s196
    %p202 = scmp.eq.s32.totalorder %s13, 0
    %p203 = por %p201, %p202
    %p204 = scmp.ne.s32.totalorder %s193, %s196
    %p205 = scmp.eq.s32.totalorder %s18, 31
    %p206 = por %p204, %p205
    %p207 = scmp.ne.s32.totalorder %s196, %s197
    %p208 = scmp.eq.s32.totalorder %s18, 0
    %p209 = por %p207, %p208
    %p210 = scmp.ne.s32.totalorder %s196, %s197
    %p211 = scmp.eq.s32.totalorder %s19, 31
    %p212 = por %p210, %p211
    %p214 = scmp.ne.s32.totalorder %s197, %s213
    %p215 = scmp.eq.s32.totalorder %s19, 0
    %p216 = por %p214, %p215
    %p217 = scmp.le.s32.totalorder 1, %s13
    %p218 = scmp.lt.s32.totalorder %s13, 33
    %p219 = pnand %p217, %p218
    %p220 = pneg %p219
    // Predicated region
    $region9: #{up_forward.8} parent=5 // pred_check
      _
    $region10: #{up_forward.8} parent=5 // pred_check_branch
      %222 = sbr.rel (%p219) target = $region12
    $region11: #{up_forward.8} parent=5 // pred_region
      %s223 = ssub.s32 %s13, 1
      // Predicated region
      $region13: #{up_forward.8} parent=11 // pred_check
        %p224 = pneg %p134
      $region14: #{up_forward.8} parent=11 // pred_check_branch
        %226 = sbr.rel (%p224) target = $region16
      $region15: #{up_forward.8} parent=11 // pred_region
        _
      $region16: #{up_forward.8} parent=11 // pred_fallthru
        _
      // Predicated region
      $region17: #{up_forward.8} parent=11 // pred_check
        %p227 = pneg %p155
      $region18: #{up_forward.8} parent=11 // pred_check_branch
        %229 = sbr.rel (%p227) target = $region20
      $region19: #{up_forward.8} parent=11 // pred_region
        _
      $region20: #{up_forward.8} parent=11 // pred_fallthru
        _
    $region12: #{up_forward.8} parent=5 // pred_fallthru
      _
    %p230 = scmp.lt.s32.totalorder %s13, 32
    // Predicated region
    $region21: #{up_forward.8} parent=5 // pred_check
      %p231 = pneg %p230
    $region22: #{up_forward.8} parent=5 // pred_check_branch
      %233 = sbr.rel (%p231) target = $region24
    $region23: #{up_forward.8} parent=5 // pred_region
      // Predicated region
      $region25: #{up_forward.8} parent=23 // pred_check
        %p234 = pneg %p47
      $region26: #{up_forward.8} parent=23 // pred_check_branch
        %236 = sbr.rel (%p234) target = $region28
      $region27: #{up_forward.8} parent=23 // pred_region
        %p237 = scmp.lt.s32.totalorder %s20, 1
        %s238 = scalar_select %p237, %s20, 1
        %p239 = scmp.lt.s32.totalorder %s21, 17
        %s240 = scalar_select %p239, %s21, 17
        %s241 = smul.addr %s240, 2
        %s242 = smul.addr %s238, 36
        %s243 = sadd.s32 %s241, %s242
        %s244 = smul.addr %s243, 8
        %s245 = scalar_lea.vmem %s0, %s244
      $region28: #{up_forward.8} parent=23 // pred_fallthru
        _
      // Predicated region
      $region29: #{up_forward.8} parent=23 // pred_check
        %p246 = pneg %p77
      $region30: #{up_forward.8} parent=23 // pred_check_branch
        %248 = sbr.rel (%p246) target = $region32
      $region31: #{up_forward.8} parent=23 // pred_region
        %s249 = sadd.s32 %s21, 1
        %p250 = scmp.lt.s32.totalorder %s20, 1
        %s251 = scalar_select %p250, %s20, 1
        %p252 = scmp.lt.s32.totalorder %s249, 17
        %s253 = scalar_select %p252, %s249, 17
        %s254 = smul.addr %s253, 2
        %s255 = smul.addr %s251, 36
        %s256 = sadd.s32 %s254, %s255
        %s257 = smul.addr %s256, 8
        %s258 = scalar_lea.vmem %s1, %s257
        %s259 = sadd.s32 %s21, 1
      $region32: #{up_forward.8} parent=23 // pred_fallthru
        _
      // Predicated region
      $region33: #{up_forward.8} parent=23 // pred_check
        %p260 = pneg %p107
      $region34: #{up_forward.8} parent=23 // pred_check_branch
        %262 = sbr.rel (%p260) target = $region36
      $region35: #{up_forward.8} parent=23 // pred_region
        %s263 = sadd.s32 %s21, 2
        %p264 = scmp.lt.s32.totalorder %s20, 1
        %s265 = scalar_select %p264, %s20, 1
        %p266 = scmp.lt.s32.totalorder %s263, 17
        %s267 = scalar_select %p266, %s263, 17
        %s268 = smul.addr %s267, 2
        %s269 = smul.addr %s265, 36
        %s270 = sadd.s32 %s268, %s269
        %s271 = smul.addr %s270, 8
        %s272 = scalar_lea.vmem %s2, %s271
        %s273 = sadd.s32 %s21, 2
      $region36: #{up_forward.8} parent=23 // pred_fallthru
        _
    $region24: #{up_forward.8} parent=5 // pred_fallthru
      _
    %p274 = scmp.le.s32.totalorder 1, %s13
    %p275 = scmp.lt.s32.totalorder %s13, 33
    %p276 = pnand %p274, %p275
    %p277 = pneg %p276
    // Predicated region
    $region37: #{up_forward.8} parent=5 // pred_check
      _
    $region38: #{up_forward.8} parent=5 // pred_check_branch
      %279 = sbr.rel (%p276) target = $region40
    $region39: #{up_forward.8} parent=5 // pred_region
      %s280 = ssub.s32 %s13, 1
      %p281 = scmp.lt.s32.totalorder %s22, 1
      %s282 = scalar_select %p281, %s22, 1
      %p283 = scmp.lt.s32.totalorder %s23, 17
      %s284 = scalar_select %p283, %s23, 17
      %s285 = smul.addr %s284, 2
      %s286 = smul.addr %s282, 36
      %s287 = sadd.s32 %s285, %s286
      %s288 = smul.addr %s287, 8
      %s289 = scalar_lea.vmem %s0, %s288
      %p290 = pneg %p53
      %p291 = pneg %p50
      %s292 = sadd.s32 %s23, 1
      %p293 = scmp.lt.s32.totalorder %s22, 1
      %s294 = scalar_select %p293, %s22, 1
      %p295 = scmp.lt.s32.totalorder %s292, 17
      %s296 = scalar_select %p295, %s292, 17
      %s297 = smul.addr %s296, 2
      %s298 = smul.addr %s294, 36
      %s299 = sadd.s32 %s297, %s298
      %s300 = smul.addr %s299, 8
      %s301 = scalar_lea.vmem %s1, %s300
      %p302 = pneg %p83
      %p303 = pneg %p80
      %s304 = sadd.s32 %s23, 2
      %p305 = scmp.lt.s32.totalorder %s22, 1
      %s306 = scalar_select %p305, %s22, 1
      %p307 = scmp.lt.s32.totalorder %s304, 17
      %s308 = scalar_select %p307, %s304, 17
      %s309 = smul.addr %s308, 2
      %s310 = smul.addr %s306, 36
      %s311 = sadd.s32 %s309, %s310
      %s312 = smul.addr %s311, 8
      %s313 = scalar_lea.vmem %s2, %s312
      %p314 = pneg %p113
      %p315 = pneg %p110
      %p316 = pneg %p134
      %p317 = pneg %p131
      %p318 = pneg %p155
      %p319 = pneg %p152
      %p320 = pneg %p183
      %p321 = pneg %p180
      %p322 = scmp.lt.s32.totalorder %s22, 1
      %s323 = scalar_select %p322, %s22, 1
      %p324 = scmp.lt.s32.totalorder %s23, 15
      %s325 = scalar_select %p324, %s23, 15
      %s326 = smul.addr %s325, 2
      %s327 = smul.addr %s323, 32
      %s328 = sadd.s32 %s326, %s327
      %s329 = smul.addr %s328, 8
      %s330 = scalar_lea.vmem %s5, %s329
      %p331 = pneg %p209
      %p332 = pneg %p206
      %p333 = scmp.lt.s32.totalorder %s22, 1
      %s334 = scalar_select %p333, %s22, 1
      %s335 = smul.addr %s334, 8
      %s336 = scalar_lea.vmem %s6, %s335
      %p337 = scmp.lt.s32.totalorder %s22, 1
      %s338 = scalar_select %p337, %s22, 1
      %p339 = scmp.lt.s32.totalorder %s23, 17
      %s340 = scalar_select %p339, %s23, 17
      %s341 = smul.addr %s340, 2
      %s342 = smul.addr %s338, 36
      %s343 = sadd.s32 %s341, %s342
      %s344 = smul.addr %s343, 8
      %s345 = scalar_lea.vmem %s0, %s344
      %s346 = sadd.s32 %s23, 1
      %p347 = scmp.lt.s32.totalorder %s22, 1
      %s348 = scalar_select %p347, %s22, 1
      %p349 = scmp.lt.s32.totalorder %s346, 17
      %s350 = scalar_select %p349, %s346, 17
      %s351 = smul.addr %s350, 2
      %s352 = smul.addr %s348, 36
      %s353 = sadd.s32 %s351, %s352
      %s354 = smul.addr %s353, 8
      %s355 = scalar_lea.vmem %s1, %s354
      %s356 = sadd.s32 %s23, 1
      %s357 = sadd.s32 %s23, 2
      %p358 = scmp.lt.s32.totalorder %s22, 1
      %s359 = scalar_select %p358, %s22, 1
      %p360 = scmp.lt.s32.totalorder %s357, 17
      %s361 = scalar_select %p360, %s357, 17
      %s362 = smul.addr %s361, 2
      %s363 = smul.addr %s359, 36
      %s364 = sadd.s32 %s362, %s363
      %s365 = smul.addr %s364, 8
      %s366 = scalar_lea.vmem %s2, %s365
      %s367 = sadd.s32 %s23, 2
      %p368 = scmp.lt.s32.totalorder %s22, 1
      %s369 = scalar_select %p368, %s22, 1
      %p370 = scmp.lt.s32.totalorder %s23, 15
      %s371 = scalar_select %p370, %s23, 15
      %s372 = smul.addr %s371, 2
      %s373 = smul.addr %s369, 32
      %s374 = sadd.s32 %s372, %s373
      %s375 = smul.addr %s374, 8
      %s376 = scalar_lea.vmem %s5, %s375
      %p377 = scmp.lt.s32.totalorder %s22, 1
      %s378 = scalar_select %p377, %s22, 1
      %s379 = smul.addr %s378, 8
      %s380 = scalar_lea.vmem %s6, %s379
      %v381 = vld [vmem:[%s345] sm:$0xff]
      %v382 = vld [vmem:[%s345 + $0x8] sm:$0xff]
      %v383 = vld [vmem:[%s3] sm:$0xff]
      %v384 = vld [vmem:[%s3 + $0x8] sm:$0xf]
      %v385 = vld [vmem:[%s355] sm:$0xff]
      %v386 = vld [vmem:[%s355 + $0x8] sm:$0xff]
      %s387 = scalar_lea.vmem %s3, 16
      %v388 = vld [vmem:[%s387] sm:$0xff]
      %v389 = vld [vmem:[%s387 + $0x8] sm:$0xf]
      %vm390 = vcmask 97280
      %v392 = vsel %vm390, %v385, 0
      %v395 = vsel %vm390, %v386, 0
      %vm397 = vcmask 1043456
      %v399 = vsel %vm397, %v389, 0
      %401 = vmatprep.subr.mxu0 0.0
      %402 = vmatpush1.msra.mxu0 0.0
      %403 = vmatprep.subr.mxu0 0.0
      %404 = vmatpush1.msra.mxu0 0.0
      %405 = vmatprep.subr.mxu0 0.0
      %406 = vmatpush1.msra.mxu0 0.0
      %407 = vmatprep.subr.mxu0 0.0
      %408 = vmatpush1.msra.mxu0 0.0
      %409 = vmatprep.subr.mxu0 0.0
      %410 = vmatpush1.msra.mxu0 0.0
      %411 = vmatprep.subr.mxu0 0.0
      %412 = vmatpush1.msra.mxu0 0.0
      %413 = vmatprep.subr.mxu0 0.0
      %414 = vmatpush1.msra.mxu0 0.0
      %415 = vmatprep.subr.mxu0 0.0
      %416 = vmatpush1.msra.mxu0 0.0
      %417 = vmatprep.subr.mxu0 0.0
      %418 = vmatpush1.msra.mxu0 0.0
      %419 = vmatprep.subr.mxu0 0.0
      %420 = vmatpush1.msra.mxu0 0.0
      %421 = vmatprep.subr.mxu0 0.0
      %422 = vmatpush1.msra.mxu0 0.0
      %423 = vmatprep.subr.mxu0 0.0
      %424 = vmatpush1.msra.mxu0 0.0
      %425 = vmatprep.subr.mxu0 0.0
      %426 = vmatpush1.msra.mxu0 0.0
      %427 = vmatprep.subr.mxu0 0.0
      %428 = vmatpush1.msra.mxu0 0.0
      %429 = vmatprep.subr.mxu0 0.0
      %430 = vmatpush1.msra.mxu0 %v399
      %431 = vmatprep.subr.mxu0 0.0
      %432 = vmatpush1.msra.mxu0 %v388
      %433 = vmatprep.subr.mxu0 0.0
      %434 = vmatpush2.msra.mxu0 0.0
      %435 = vmatprep.subr.mxu0 0.0
      %436 = vmatpush2.msra.mxu0 0.0
      %437 = vmatprep.subr.mxu0 0.0
      %438 = vmatpush2.msra.mxu0 0.0
      %439 = vmatprep.subr.mxu0 0.0
      %440 = vmatpush2.msra.mxu0 0.0
      %441 = vmatprep.subr.mxu0 0.0
      %442 = vmatpush2.msra.mxu0 0.0
      %443 = vmatprep.subr.mxu0 0.0
      %444 = vmatpush2.msra.mxu0 0.0
      %445 = vmatprep.subr.mxu0 0.0
      %446 = vmatpush2.msra.mxu0 0.0
      %447 = vmatprep.subr.mxu0 0.0
      %448 = vmatpush2.msra.mxu0 0.0
      %449 = vmatprep.subr.mxu0 0.0
      %450 = vmatpush2.msra.mxu0 0.0
      %451 = vmatprep.subr.mxu0 0.0
      %452 = vmatpush2.msra.mxu0 0.0
      %453 = vmatprep.subr.mxu0 0.0
      %454 = vmatpush2.msra.mxu0 0.0
      %455 = vmatprep.subr.mxu0 0.0
      %456 = vmatpush2.msra.mxu0 0.0
      %457 = vmatprep.subr.mxu0 0.0
      %458 = vmatpush2.msra.mxu0 0.0
      %459 = vmatprep.subr.mxu0 0.0
      %460 = vmatpush2.msra.mxu0 0.0
      %461 = vmatprep.subr.mxu0 0.0
      %462 = vmatpush2.msra.mxu0 0.0
      %463 = vmatprep.subr.mxu0 0.0
      %464 = vmatpush2.msra.mxu0 0.0
      %465 = vmatprep.mubr.f32.mxu0 0.0
      %466 = vmatmul.mubr.f32.gmra.mxu0 %v392
      %v467 = vpop.f32.mrf.mxu0
      %v468 = vadd.f32 0.0, %v467
      %v469 = vpop.f32.mrf.mxu0
      %470 = vmatprep.mubr.f32.mxu0 0.0
      %471 = vmatmul.mubr.f32.gmra.mxu0 %v395
      %v472 = vpop.f32.mrf.mxu0
      %v473 = vadd.f32 0.0, %v472
      %v474 = vpop.f32.mrf.mxu0
      %475 = vdwg.mxu0
      %v477 = vsel %vm390, %v381, 0
      %v480 = vsel %vm390, %v382, 0
      %v483 = vsel %vm397, %v384, 0
      %485 = vmatprep.subr.mxu0 0.0
      %486 = vmatpush1.msra.mxu0 0.0
      %487 = vmatprep.subr.mxu0 0.0
      %488 = vmatpush1.msra.mxu0 0.0
      %489 = vmatprep.subr.mxu0 0.0
      %490 = vmatpush1.msra.mxu0 0.0
      %491 = vmatprep.subr.mxu0 0.0
      %492 = vmatpush1.msra.mxu0 0.0
      %493 = vmatprep.subr.mxu0 0.0
      %494 = vmatpush1.msra.mxu0 0.0
      %495 = vmatprep.subr.mxu0 0.0
      %496 = vmatpush1.msra.mxu0 0.0
      %497 = vmatprep.subr.mxu0 0.0
      %498 = vmatpush1.msra.mxu0 0.0
      %499 = vmatprep.subr.mxu0 0.0
      %500 = vmatpush1.msra.mxu0 0.0
      %501 = vmatprep.subr.mxu0 0.0
      %502 = vmatpush1.msra.mxu0 0.0
      %503 = vmatprep.subr.mxu0 0.0
      %504 = vmatpush1.msra.mxu0 0.0
      %505 = vmatprep.subr.mxu0 0.0
      %506 = vmatpush1.msra.mxu0 0.0
      %507 = vmatprep.subr.mxu0 0.0
      %508 = vmatpush1.msra.mxu0 0.0
      %509 = vmatprep.subr.mxu0 0.0
      %510 = vmatpush1.msra.mxu0 0.0
      %511 = vmatprep.subr.mxu0 0.0
      %512 = vmatpush1.msra.mxu0 0.0
      %513 = vmatprep.subr.mxu0 0.0
      %514 = vmatpush1.msra.mxu0 %v483
      %515 = vmatprep.subr.mxu0 0.0
      %516 = vmatpush1.msra.mxu0 %v383
      %517 = vmatprep.subr.mxu0 0.0
      %518 = vmatpush2.msra.mxu0 0.0
      %519 = vmatprep.subr.mxu0 0.0
      %520 = vmatpush2.msra.mxu0 0.0
      %521 = vmatprep.subr.mxu0 0.0
      %522 = vmatpush2.msra.mxu0 0.0
      %523 = vmatprep.subr.mxu0 0.0
      %524 = vmatpush2.msra.mxu0 0.0
      %525 = vmatprep.subr.mxu0 0.0
      %526 = vmatpush2.msra.mxu0 0.0
      %527 = vmatprep.subr.mxu0 0.0
      %528 = vmatpush2.msra.mxu0 0.0
      %529 = vmatprep.subr.mxu0 0.0
      %530 = vmatpush2.msra.mxu0 0.0
      %531 = vmatprep.subr.mxu0 0.0
      %532 = vmatpush2.msra.mxu0 0.0
      %533 = vmatprep.subr.mxu0 0.0
      %534 = vmatpush2.msra.mxu0 0.0
      %535 = vmatprep.subr.mxu0 0.0
      %536 = vmatpush2.msra.mxu0 0.0
      %537 = vmatprep.subr.mxu0 0.0
      %538 = vmatpush2.msra.mxu0 0.0
      %539 = vmatprep.subr.mxu0 0.0
      %540 = vmatpush2.msra.mxu0 0.0
      %541 = vmatprep.subr.mxu0 0.0
      %542 = vmatpush2.msra.mxu0 0.0
      %543 = vmatprep.subr.mxu0 0.0
      %544 = vmatpush2.msra.mxu0 0.0
      %545 = vmatprep.subr.mxu0 0.0
      %546 = vmatpush2.msra.mxu0 0.0
      %547 = vmatprep.subr.mxu0 0.0
      %548 = vmatpush2.msra.mxu0 0.0
      %549 = vmatprep.mubr.f32.mxu0 0.0
      %550 = vmatmul.mubr.f32.gmra.mxu0 %v477
      %v551 = vpop.f32.mrf.mxu0
      %v552 = vadd.f32 %v468, %v551
      %v553 = vpop.f32.mrf.mxu0
      %554 = vmatprep.mubr.f32.mxu0 0.0
      %555 = vmatmul.mubr.f32.gmra.mxu0 %v480
      %v556 = vpop.f32.mrf.mxu0
      %v557 = vadd.f32 %v473, %v556
      %v558 = vpop.f32.mrf.mxu0
      %559 = vdwg.mxu0
      %v560 = vld [vmem:[%s366] sm:$0xff]
      %v561 = vld [vmem:[%s366 + $0x8] sm:$0xff]
      %s562 = scalar_lea.vmem %s3, 32
      %v563 = vld [vmem:[%s562] sm:$0xff]
      %v564 = vld [vmem:[%s562 + $0x8] sm:$0xf]
      %v566 = vsel %vm390, %v560, 0
      %v569 = vsel %vm390, %v561, 0
      %v572 = vsel %vm397, %v564, 0
      %574 = vmatprep.subr.mxu0 0.0
      %575 = vmatpush1.msra.mxu0 0.0
      %576 = vmatprep.subr.mxu0 0.0
      %577 = vmatpush1.msra.mxu0 0.0
      %578 = vmatprep.subr.mxu0 0.0
      %579 = vmatpush1.msra.mxu0 0.0
      %580 = vmatprep.subr.mxu0 0.0
      %581 = vmatpush1.msra.mxu0 0.0
      %582 = vmatprep.subr.mxu0 0.0
      %583 = vmatpush1.msra.mxu0 0.0
      %584 = vmatprep.subr.mxu0 0.0
      %585 = vmatpush1.msra.mxu0 0.0
      %586 = vmatprep.subr.mxu0 0.0
      %587 = vmatpush1.msra.mxu0 0.0
      %588 = vmatprep.subr.mxu0 0.0
      %589 = vmatpush1.msra.mxu0 0.0
      %590 = vmatprep.subr.mxu0 0.0
      %591 = vmatpush1.msra.mxu0 0.0
      %592 = vmatprep.subr.mxu0 0.0
      %593 = vmatpush1.msra.mxu0 0.0
      %594 = vmatprep.subr.mxu0 0.0
      %595 = vmatpush1.msra.mxu0 0.0
      %596 = vmatprep.subr.mxu0 0.0
      %597 = vmatpush1.msra.mxu0 0.0
      %598 = vmatprep.subr.mxu0 0.0
      %599 = vmatpush1.msra.mxu0 0.0
      %600 = vmatprep.subr.mxu0 0.0
      %601 = vmatpush1.msra.mxu0 0.0
      %602 = vmatprep.subr.mxu0 0.0
      %603 = vmatpush1.msra.mxu0 %v572
      %604 = vmatprep.subr.mxu0 0.0
      %605 = vmatpush1.msra.mxu0 %v563
      %606 = vmatprep.subr.mxu0 0.0
      %607 = vmatpush2.msra.mxu0 0.0
      %608 = vmatprep.subr.mxu0 0.0
      %609 = vmatpush2.msra.mxu0 0.0
      %610 = vmatprep.subr.mxu0 0.0
      %611 = vmatpush2.msra.mxu0 0.0
      %612 = vmatprep.subr.mxu0 0.0
      %613 = vmatpush2.msra.mxu0 0.0
      %614 = vmatprep.subr.mxu0 0.0
      %615 = vmatpush2.msra.mxu0 0.0
      %616 = vmatprep.subr.mxu0 0.0
      %617 = vmatpush2.msra.mxu0 0.0
      %618 = vmatprep.subr.mxu0 0.0
      %619 = vmatpush2.msra.mxu0 0.0
      %620 = vmatprep.subr.mxu0 0.0
      %621 = vmatpush2.msra.mxu0 0.0
      %622 = vmatprep.subr.mxu0 0.0
      %623 = vmatpush2.msra.mxu0 0.0
      %624 = vmatprep.subr.mxu0 0.0
      %625 = vmatpush2.msra.mxu0 0.0
      %626 = vmatprep.subr.mxu0 0.0
      %627 = vmatpush2.msra.mxu0 0.0
      %628 = vmatprep.subr.mxu0 0.0
      %629 = vmatpush2.msra.mxu0 0.0
      %630 = vmatprep.subr.mxu0 0.0
      %631 = vmatpush2.msra.mxu0 0.0
      %632 = vmatprep.subr.mxu0 0.0
      %633 = vmatpush2.msra.mxu0 0.0
      %634 = vmatprep.subr.mxu0 0.0
      %635 = vmatpush2.msra.mxu0 0.0
      %636 = vmatprep.subr.mxu0 0.0
      %637 = vmatpush2.msra.mxu0 0.0
      %638 = vmatprep.mubr.f32.mxu0 0.0
      %639 = vmatmul.mubr.f32.gmra.mxu0 %v566
      %v640 = vpop.f32.mrf.mxu0
      %v641 = vadd.f32 0.0, %v640
      %v642 = vpop.f32.mrf.mxu0
      %643 = vmatprep.mubr.f32.mxu0 0.0
      %644 = vmatmul.mubr.f32.gmra.mxu0 %v569
      %v645 = vpop.f32.mrf.mxu0
      %v646 = vadd.f32 0.0, %v645
      %v647 = vpop.f32.mrf.mxu0
      %648 = vdwg.mxu0
      %v649 = vadd.f32 %v552, %v641
      %v650 = vadd.f32 %v557, %v646
      %v651 = vld [vmem:[%s4] sm:$0x1]
      %v653 = vlaneseq
      %v654 = vshrl.u32 %v653, 7
      %v655 = vsub.s32 0, %v654
      %v656 = vrot.slane %v651, %v655
      %v658 = vadd.f32 %v649, %v656
      %v659 = vadd.f32 %v650, %v656
      %660 = vst [vmem:[%s376] sm:$0xff] %v658
      %661 = vst [vmem:[%s376 + $0x8] sm:$0xff] %v659
      %p662 = scmp.eq.s32.totalorder %s23, 0
      // Predicated region
      $region41: #{up_forward.8} parent=39 // pred_check
        %p663 = pneg %p662
      $region42: #{up_forward.8} parent=39 // pred_check_branch
        %665 = sbr.rel (%p663) target = $region44
      $region43: #{up_forward.8} parent=39 // pred_region
        %666 = vst [vmem:[%s380] sm:$0xff] 0.0
      $region44: #{up_forward.8} parent=39 // pred_fallthru
        _
      %v667 = vld [vmem:[%s380] sm:$0x1]
      %v668 = vadd.f32 %v658, %v659
      %v669 = vrot.slane %v668, 4
      %v670 = vadd.f32 %v668, %v669
      %v671 = vrot.slane %v670, 2
      %v672 = vadd.f32 %v670, %v671
      %v673 = vrot.slane %v672, 1
      %v674 = vadd.f32 %v672, %v673
      %v675 = vadd.f32 %v667, %v674
      %676 = vst [vmem:[%s380] sm:$0x1] %v675
      %v677 = vld [vmem:[%s380 + $0x1] sm:$0x1]
      %v678 = vmul.f32 %v658, %v658
      %v679 = vmul.f32 %v659, %v659
      %v680 = vadd.f32 %v678, %v679
      %v681 = vrot.slane %v680, 4
      %v682 = vadd.f32 %v680, %v681
      %v683 = vrot.slane %v682, 2
      %v684 = vadd.f32 %v682, %v683
      %v685 = vrot.slane %v684, 1
      %v686 = vadd.f32 %v684, %v685
      %v687 = vadd.f32 %v677, %v686
      %688 = vst [vmem:[%s380 + $0x1] sm:$0x1] %v687
      %p689 = scmp.lt.s32.totalorder %s22, 1
      %s690 = scalar_select %p689, %s22, 1
      %p691 = scmp.lt.s32.totalorder %s23, 15
      %s692 = scalar_select %p691, %s23, 15
      %s693 = smul.addr %s692, 2
      %s694 = smul.addr %s690, 32
      %s695 = sadd.s32 %s693, %s694
      %s696 = smul.addr %s695, 8
      %s697 = scalar_lea.vmem %s5, %s696
      %p698 = scmp.lt.s32.totalorder %s22, 1
      %s699 = scalar_select %p698, %s22, 1
      %s700 = smul.addr %s699, 8
      %s701 = scalar_lea.vmem %s6, %s700
      // Predicated region
      $region45: #{up_forward.8} parent=39 // pred_check
        %p702 = pneg %p180
      $region46: #{up_forward.8} parent=39 // pred_check_branch
        %704 = sbr.rel (%p702) target = $region48
      $region47: #{up_forward.8} parent=39 // pred_region
        _
      $region48: #{up_forward.8} parent=39 // pred_fallthru
        _
      // Predicated region
      $region49: #{up_forward.8} parent=39 // pred_check
        %p705 = pneg %p206
      $region50: #{up_forward.8} parent=39 // pred_check_branch
        %707 = sbr.rel (%p705) target = $region52
      $region51: #{up_forward.8} parent=39 // pred_region
        _
      $region52: #{up_forward.8} parent=39 // pred_fallthru
        _
    $region40: #{up_forward.8} parent=5 // pred_fallthru
      _
    %p708 = scmp.le.s32.totalorder 2, %s13
    // Predicated region
    $region53: #{up_forward.8} parent=5 // pred_check
      %p709 = pneg %p708
    $region54: #{up_forward.8} parent=5 // pred_check_branch
      %711 = sbr.rel (%p709) target = $region56
    $region55: #{up_forward.8} parent=5 // pred_region
      %s712 = ssub.s32 %s13, 2
      // Predicated region
      $region57: #{up_forward.8} parent=55 // pred_check
        %p713 = pneg %p186
      $region58: #{up_forward.8} parent=55 // pred_check_branch
        %715 = sbr.rel (%p713) target = $region60
      $region59: #{up_forward.8} parent=55 // pred_region
        %p716 = scmp.lt.s32.totalorder %s24, 1
        %s717 = scalar_select %p716, %s24, 1
        %p718 = scmp.lt.s32.totalorder %s25, 15
        %s719 = scalar_select %p718, %s25, 15
        %s720 = smul.addr %s719, 2
        %s721 = smul.addr %s717, 32
        %s722 = sadd.s32 %s720, %s721
        %s723 = smul.addr %s722, 8
        %s724 = scalar_lea.vmem %s5, %s723
      $region60: #{up_forward.8} parent=55 // pred_fallthru
        _
      // Predicated region
      $region61: #{up_forward.8} parent=55 // pred_check
        %p725 = pneg %p212
      $region62: #{up_forward.8} parent=55 // pred_check_branch
        %727 = sbr.rel (%p725) target = $region64
      $region63: #{up_forward.8} parent=55 // pred_region
        %p728 = scmp.lt.s32.totalorder %s24, 1
        %s729 = scalar_select %p728, %s24, 1
        %s730 = smul.addr %s729, 8
        %s731 = scalar_lea.vmem %s6, %s730
      $region64: #{up_forward.8} parent=55 // pred_fallthru
        _
    $region56: #{up_forward.8} parent=5 // pred_fallthru
      _
  $region6: #{up_forward.8} parent=0 // loop_footer
    %s17 = sadd.s32 1, %s13
  $region7: #{up_forward.8} parent=0 // loop_footer_branch
    %12 = sbr.rel target = $region3
  $region8: #{up_forward.8} parent=0 // loop_exit
    _

</llo_original>
